<compile_context>
chip_gen: v7x
topology: tpu7x:2x2x1
jax: 0.10.0
libtpu: 0.0.40
codegen_flags: <defaults>
</compile_context>

<pallas_src>
import functools

import jax
import jax.numpy as jnp
from jax import lax
from jax.experimental import pallas as pl
from jax.experimental.pallas import tpu as pltpu


def _round_up(v, mult):
    return ((v + mult - 1) // mult) * mult


def _pad_axis(x, target, axis):
    pad = target - x.shape[axis]
    if pad <= 0:
        return x
    widths = [(0, 0)] * x.ndim
    widths[axis] = (0, pad)
    return jnp.pad(x, widths)


def _vmem_capacity_bytes():
    """Per-core VMEM capacity; conservative 64 MiB (v7x) fallback."""
    try:
        info = pltpu.get_tpu_info()
        cap = getattr(info, "vmem_capacity_bytes", None)
        if cap:
            return int(cap)
    except Exception:
        pass
    return 64 * 1024 * 1024


def _choose_batch_tile(B, m, n_p, Dp, Hp, mm_item, vmem_capacity, target_rows=1024):
    """Pick Bt (whole batches per grid step) under a VMEM budget.

    Budget assumes the worst case of double-buffered weights (in case the
    single-buffer request is rejected) plus double-buffered streamed tiles.
    """
    weight_bytes = 2 * (mm_item * (Dp * Hp + Hp * Dp) + 4 * (Hp + Dp))
    # Streamed bytes per batch in a tile: leaked f32, z bf16, out f32, x2 buffers.
    per_batch = 2 * (4 * m * Dp + mm_item * n_p * Dp + 4 * n_p * Dp)
    budget = (3 * vmem_capacity) // 4 - weight_bytes
    bt = min(max(budget // per_batch, 1), max(target_rows // n_p, 1), B)
    if B >= 2:
        # Keep at least 2 grid steps so v7x's two TensorCores both get work.
        bt = min(bt, (B + 1) // 2)
    return max(int(bt), 1)


def gim_kernel(leaked_ref, z_ref, w1_ref, b1_ref, w2_ref, b2_ref, out_ref,
               *, bt, n, n_p):
    dp = out_ref.shape[-1]

    # Per-batch source mean over the m leaked samples (f32, VPU/XLU).
    src = jnp.mean(leaked_ref[...], axis=1)                          # (Bt, Dp)

    # env_noise_mapper as one fused (Bt*n_p, Dp) x (Dp, Hp) x (Hp, Dp) MLP.
    mm_dtype = w1_ref.dtype
    z = z_ref[...]                                                   # (Bt*n_p, Dp) bf16
    h = jnp.dot(z, w1_ref[...],
                preferred_element_type=jnp.float32) + b1_ref[...]    # (Bt*n_p, Hp) f32
    h = jnp.maximum(h, 0.0)
    w = jnp.dot(h.astype(mm_dtype), w2_ref[...],
                preferred_element_type=jnp.float32) + b2_ref[...]    # (Bt*n_p, Dp) f32

    # remove_noise_mean=True: per-batch mean over the *true* n noise rows.
    # n_p % 8 == 0 so these reshapes are sublane-tile aligned (pure views).
    w3 = w.reshape(bt, n_p, dp)                                      # (Bt, n_p, Dp)
    if n_p == n:
        w_mean = jnp.mean(w3, axis=1, keepdims=True)                 # (Bt, 1, Dp)
    else:
        row_ids = lax.broadcasted_iota(jnp.int32, (1, n_p, 1), 1)
        mask = (row_ids < n).astype(jnp.float32)
        w_mean = jnp.sum(w3 * mask, axis=1, keepdims=True) * (1.0 / n)

    out3 = w3 - w_mean + src[:, None, :]                             # (Bt, n_p, Dp)
    out_ref[...] = out3.reshape(bt * n_p, dp).astype(out_ref.dtype)  # lane-dense store


def gim_gaussian_forward(leaked_sample, z, params, *, matmul_dtype=jnp.bfloat16):
    """leaked_sample: (B, m, D) f32; z: (B, n, D) f32; returns (B, n, D) f32."""
    B, m, D = leaked_sample.shape
    _, n, _ = z.shape
    w1, b1, w2, b2 = params
    H = w1.shape[1]

    LANE = 128
    SUBLANE = 8
    mm_item = jnp.dtype(matmul_dtype).itemsize

    Dp = _round_up(D, LANE)
    Hp = _round_up(H, LANE)
    n_p = _round_up(n, SUBLANE)

    vmem_capacity = _vmem_capacity_bytes()
    Bt = _choose_batch_tile(B, m, n_p, Dp, Hp, mm_item, vmem_capacity)
    B_p = _round_up(B, Bt)          # zero-pad whole batches; no unbounded fallback
    rows = Bt * n_p
    grid = (B_p // Bt,)

    # --- Host-side padding (padded rows/cols stay exactly zero). -------------
    leaked_p = _pad_axis(_pad_axis(leaked_sample, Dp, 2), B_p, 0)    # (B_p, m, Dp) f32
    z_p = _pad_axis(_pad_axis(_pad_axis(z, Dp, 2), n_p, 1), B_p, 0)  # (B_p, n_p, Dp)
    z_p = z_p.reshape(B_p * n_p, Dp).astype(matmul_dtype)            # bf16 stream
    w1_p = _pad_axis(_pad_axis(w1, Dp, 0), Hp, 1).astype(matmul_dtype)
    b1_p = _pad_axis(b1, Hp, 1)                                      # (1, Hp) f32
    w2_p = _pad_axis(_pad_axis(w2, Hp, 0), Dp, 1).astype(matmul_dtype)
    b2_p = _pad_axis(b2, Dp, 1)                                      # (1, Dp) f32

    kernel = functools.partial(gim_kernel, bt=Bt, n=n, n_p=n_p)

    # --- Cost / VMEM bookkeeping. --------------------------------------------
    total_rows = B_p * n_p
    flops = 4 * total_rows * Dp * Hp
    bytes_accessed = (
        4 * leaked_p.size
        + mm_item * (z_p.size + w1_p.size + w2_p.size)
        + 4 * (b1_p.size + b2_p.size)
        + 4 * total_rows * Dp
    )
    weight_bytes = 2 * (mm_item * (Dp * Hp + Hp * Dp) + 4 * (Hp + Dp))
    stream_bytes = 2 * Bt * (4 * m * Dp + mm_item * n_p * Dp + 4 * n_p * Dp)
    need = weight_bytes + stream_bytes
    vmem_cap = min(64 * 1024 * 1024, (3 * vmem_capacity) // 4)
    vmem_limit = int(min(vmem_cap,
                         max(4 * 1024 * 1024, int(1.5 * need) + 2 * 1024 * 1024)))

    def _call(weight_pipeline):
        def weight_spec(shape):
            if weight_pipeline is None:
                return pl.BlockSpec(shape, lambda b: (0,) * len(shape))
            return pl.BlockSpec(shape, lambda b: (0,) * len(shape),
                                pipeline_mode=weight_pipeline)

        return pl.pallas_call(
            kernel,
            out_shape=jax.ShapeDtypeStruct((B_p * n_p, Dp), leaked_sample.dtype),
            grid_spec=pl.GridSpec(
                grid=grid,
                in_specs=[
                    pl.BlockSpec((Bt, m, Dp), lambda b: (b, 0, 0)),   # leaked
                    pl.BlockSpec((rows, Dp), lambda b: (b, 0)),       # z (batch-fused)
                    weight_spec((Dp, Hp)),                            # W1
                    weight_spec((1, Hp)),                             # b1
                    weight_spec((Hp, Dp)),                            # W2
                    weight_spec((1, Dp)),                             # b2
                ],
                out_specs=pl.BlockSpec((rows, Dp), lambda b: (b, 0)), # lane-dense
            ),
            compiler_params=pltpu.CompilerParams(
                dimension_semantics=("parallel",),
                vmem_limit_bytes=vmem_limit,
            ),
            cost_estimate=pl.CostEstimate(
                flops=flops, transcendentals=0, bytes_accessed=bytes_accessed),
        )(leaked_p, z_p, w1_p, b1_p, w2_p, b2_p)

    try:
        # Grid-invariant weights/biases: single-buffer to halve their VMEM use.
        out_p = _call(pl.Buffered(1))
    except Exception:
        # Fallback: default double-buffered specs (previously validated path).
        out_p = _call(None)

    # Strip batch / noise-row / lane padding; reshape back to (B, n, D).
    return out_p.reshape(B_p, n_p, Dp)[:B, :n, :D]


def make_params(key, src_dim):
    """Deterministic env_noise_mapper params: Linear(D, 2D) + ReLU + Linear(2D, D)."""
    hidden = 2 * src_dim
    k1, k2, k3, k4 = jax.random.split(key, 4)
    w1 = jax.random.normal(k1, (src_dim, hidden), jnp.float32) * (1.0 / jnp.sqrt(src_dim))
    b1 = jax.random.normal(k2, (1, hidden), jnp.float32) * 0.01
    w2 = jax.random.normal(k3, (hidden, src_dim), jnp.float32) * (1.0 / jnp.sqrt(hidden))
    b2 = jax.random.normal(k4, (1, src_dim), jnp.float32) * 0.01
    return w1, b1, w2, b2


def reference(leaked_sample, z, params, matmul_dtype=jnp.float32):
    """Pure-JAX reference. `matmul_dtype` mirrors the kernel's MXU operand dtype."""
    w1, b1, w2, b2 = params
    src = jnp.mean(leaked_sample, axis=1)                            # (B, D)
    h = jnp.einsum("bnd,dh->bnh", z.astype(matmul_dtype), w1.astype(matmul_dtype),
                   preferred_element_type=jnp.float32) + b1[0]
    h = jnp.maximum(h, 0.0)
    w = jnp.einsum("bnh,hd->bnd", h.astype(matmul_dtype), w2.astype(matmul_dtype),
                   preferred_element_type=jnp.float32) + b2[0]
    return w - jnp.mean(w, axis=1, keepdims=True) + src[:, None, :]


if __name__ == "__main__":
    B, m, n, src_dim = 2, 8, 8, 32

    key = jax.random.PRNGKey(0)
    k_leak, k_z, k_params = jax.random.split(key, 3)

    leaked_sample = jax.random.normal(k_leak, (B, m, src_dim), jnp.float32)
    # torch.randn((B, n, src_dim)) equivalent, drawn deterministically here.
    z = jax.random.normal(k_z, (B, n, src_dim), jnp.float32)
    params = make_params(k_params, src_dim)

    out = gim_gaussian_forward(leaked_sample, z, params)
    out = jax.block_until_ready(out)
    assert out.shape == (B, n, src_dim)

    # Exact plumbing check against a reference that uses the same bf16 MXU
    # operand dtype (f32 accumulation) as the kernel.
    ref_mx = reference(leaked_sample, z, params, matmul_dtype=jnp.bfloat16)
    assert jnp.allclose(out, ref_mx, atol=1e-4, rtol=1e-4), "mismatch vs matched reference"

    # Loose fidelity check against the exact f32 module semantics
    # (only difference is bf16 rounding of MXU operands).
    ref_f32 = reference(leaked_sample, z, params, matmul_dtype=jnp.float32)
    assert jnp.allclose(out, ref_f32, atol=1e-1, rtol=1e-1), "mismatch vs f32 reference"

    print("KERNEL_OK")
</pallas_src>

<mosaic_0001>
module attributes {stable_mosaic.version = 11 : i64} {
  func.func @gim_kernel(%arg0: i32, %arg1: memref<1x8x128xf32, #tpu.memory_space<vmem>>, %arg2: memref<8x128xbf16, #tpu.memory_space<vmem>>, %arg3: memref<128x128xbf16, #tpu.memory_space<vmem>>, %arg4: memref<1x128xf32, #tpu.memory_space<vmem>>, %arg5: memref<128x128xbf16, #tpu.memory_space<vmem>>, %arg6: memref<1x128xf32, #tpu.memory_space<vmem>>, %arg7: memref<8x128xf32, #tpu.memory_space<vmem>>) attributes {dimension_semantics = [#tpu.dimension_semantics<parallel>], iteration_bounds = array<i64: 2>, scalar_prefetch = 0 : i64, scratch_operands = 0 : i64, tpu.core_type = #tpu.core_type<tc>, window_params = [{transform_indices = @transform_0, window_bounds = array<i64: 1, 8, 128>}, {transform_indices = @transform_1, window_bounds = array<i64: 8, 128>}, {pipeline_mode = #tpu.pipeline_mode<synchronous>, transform_indices = @transform_2, window_bounds = array<i64: 128, 128>}, {pipeline_mode = #tpu.pipeline_mode<synchronous>, transform_indices = @transform_3, window_bounds = array<i64: 1, 128>}, {pipeline_mode = #tpu.pipeline_mode<synchronous>, transform_indices = @transform_4, window_bounds = array<i64: 128, 128>}, {pipeline_mode = #tpu.pipeline_mode<synchronous>, transform_indices = @transform_5, window_bounds = array<i64: 1, 128>}, {transform_indices = @transform_6, window_bounds = array<i64: 8, 128>}]} {
    %c0 = arith.constant 0 : index
    %c0_0 = arith.constant 0 : index
    %c0_1 = arith.constant 0 : index
    %0 = vector.load %arg1[%c0, %c0_0, %c0_1] : memref<1x8x128xf32, #tpu.memory_space<vmem>>, vector<1x8x128xf32>
    %cst = arith.constant dense<0.000000e+00> : vector<1x128xf32>
    %1 = vector.multi_reduction <add>, %0, %cst [1] : vector<1x8x128xf32> to vector<1x128xf32>
    %cst_2 = arith.constant 8.000000e+00 : f32
    %2 = vector.broadcast %cst_2 : f32 to vector<1x128xf32>
    %3 = arith.divf %1, %2 : vector<1x128xf32>
    %c0_3 = arith.constant 0 : index
    %c0_4 = arith.constant 0 : index
    %4 = vector.load %arg2[%c0_3, %c0_4] : memref<8x128xbf16, #tpu.memory_space<vmem>>, vector<8x128xbf16>
    %c0_5 = arith.constant 0 : index
    %c0_6 = arith.constant 0 : index
    %5 = vector.load %arg3[%c0_5, %c0_6] : memref<128x128xbf16, #tpu.memory_space<vmem>>, vector<128x128xbf16>
    %cst_7 = arith.constant dense<0.000000e+00> : vector<8x128xf32>
    %6 = tpu.matmul %4, %5, %cst_7 {dimension_numbers = #tpu.dot_dimension_numbers<[1], [0], [0], [1], [0, 0, 1, 1], [], []>} : vector<8x128xbf16>, vector<128x128xbf16>, vector<8x128xf32> -> vector<8x128xf32>
    %c0_8 = arith.constant 0 : index
    %c0_9 = arith.constant 0 : index
    %7 = vector.load %arg4[%c0_8, %c0_9] : memref<1x128xf32, #tpu.memory_space<vmem>>, vector<1x128xf32>
    %8 = vector.broadcast %7 : vector<1x128xf32> to vector<8x128xf32>
    %9 = arith.addf %6, %8 : vector<8x128xf32>
    %cst_10 = arith.constant 0.000000e+00 : f32
    %10 = vector.broadcast %cst_10 : f32 to vector<8x128xf32>
    %11 = arith.maximumf %9, %10 : vector<8x128xf32>
    %12 = arith.truncf %11 : vector<8x128xf32> to vector<8x128xbf16>
    %c0_11 = arith.constant 0 : index
    %c0_12 = arith.constant 0 : index
    %13 = vector.load %arg5[%c0_11, %c0_12] : memref<128x128xbf16, #tpu.memory_space<vmem>>, vector<128x128xbf16>
    %cst_13 = arith.constant dense<0.000000e+00> : vector<8x128xf32>
    %14 = tpu.matmul %12, %13, %cst_13 {dimension_numbers = #tpu.dot_dimension_numbers<[1], [0], [0], [1], [0, 0, 1, 1], [], []>} : vector<8x128xbf16>, vector<128x128xbf16>, vector<8x128xf32> -> vector<8x128xf32>
    %c0_14 = arith.constant 0 : index
    %c0_15 = arith.constant 0 : index
    %15 = vector.load %arg6[%c0_14, %c0_15] : memref<1x128xf32, #tpu.memory_space<vmem>>, vector<1x128xf32>
    %16 = vector.broadcast %15 : vector<1x128xf32> to vector<8x128xf32>
    %17 = arith.addf %14, %16 : vector<8x128xf32>
    %18 = vector.shape_cast %17 : vector<8x128xf32> to vector<1x8x128xf32>
    %cst_16 = arith.constant dense<0.000000e+00> : vector<1x128xf32>
    %19 = vector.multi_reduction <add>, %18, %cst_16 [1] : vector<1x8x128xf32> to vector<1x128xf32>
    %20 = vector.shape_cast %19 : vector<1x128xf32> to vector<1x1x128xf32>
    %cst_17 = arith.constant 8.000000e+00 : f32
    %21 = vector.broadcast %cst_17 : f32 to vector<1x1x128xf32>
    %22 = arith.divf %20, %21 : vector<1x1x128xf32>
    %23 = vector.broadcast %22 : vector<1x1x128xf32> to vector<1x8x128xf32>
    %24 = arith.subf %18, %23 : vector<1x8x128xf32>
    %25 = vector.shape_cast %3 : vector<1x128xf32> to vector<1x1x128xf32>
    %26 = vector.broadcast %25 : vector<1x1x128xf32> to vector<1x8x128xf32>
    %27 = arith.addf %24, %26 : vector<1x8x128xf32>
    %28 = vector.shape_cast %27 : vector<1x8x128xf32> to vector<8x128xf32>
    %c0_18 = arith.constant 0 : index
    %c0_19 = arith.constant 0 : index
    %29 = vector.load %arg7[%c0_18, %c0_19] : memref<8x128xf32, #tpu.memory_space<vmem>>, vector<8x128xf32>
    tpu.vector_store %arg7[%c0_18, %c0_19], %28 {strides = array<i32>} : memref<8x128xf32, #tpu.memory_space<vmem>>, vector<8x128xf32>,
    return
  }
  func.func @transform_0(%arg0: i32) -> (i32, i32, i32) {
    %c0_i32 = arith.constant 0 : i32
    %c0_i32_0 = arith.constant 0 : i32
    %c0_i32_1 = arith.constant 0 : i32
    return %arg0, %c0_i32, %c0_i32_0 : i32, i32, i32
  }
  func.func @transform_1(%arg0: i32) -> (i32, i32) {
    %c0_i32 = arith.constant 0 : i32
    %c0_i32_0 = arith.constant 0 : i32
    return %arg0, %c0_i32 : i32, i32
  }
  func.func @transform_2(%arg0: i32) -> (i32, i32) {
    %c0_i32 = arith.constant 0 : i32
    %c0_i32_0 = arith.constant 0 : i32
    %c0_i32_1 = arith.constant 0 : i32
    return %c0_i32, %c0_i32_0 : i32, i32
  }
  func.func @transform_3(%arg0: i32) -> (i32, i32) {
    %c0_i32 = arith.constant 0 : i32
    %c0_i32_0 = arith.constant 0 : i32
    %c0_i32_1 = arith.constant 0 : i32
    return %c0_i32, %c0_i32_0 : i32, i32
  }
  func.func @transform_4(%arg0: i32) -> (i32, i32) {
    %c0_i32 = arith.constant 0 : i32
    %c0_i32_0 = arith.constant 0 : i32
    %c0_i32_1 = arith.constant 0 : i32
    return %c0_i32, %c0_i32_0 : i32, i32
  }
  func.func @transform_5(%arg0: i32) -> (i32, i32) {
    %c0_i32 = arith.constant 0 : i32
    %c0_i32_0 = arith.constant 0 : i32
    %c0_i32_1 = arith.constant 0 : i32
    return %c0_i32, %c0_i32_0 : i32, i32
  }
  func.func @transform_6(%arg0: i32) -> (i32, i32) {
    %c0_i32 = arith.constant 0 : i32
    %c0_i32_0 = arith.constant 0 : i32
    return %arg0, %c0_i32 : i32, i32
  }
}

module attributes {stable_mosaic.version = 11 : i64} {
  func.func @gim_kernel(%arg0: i32, %arg1: memref<1x8x128xf32, #tpu.memory_space<vmem>>, %arg2: memref<8x128xbf16, #tpu.memory_space<vmem>>, %arg3: memref<128x128xbf16, #tpu.memory_space<vmem>>, %arg4: memref<1x128xf32, #tpu.memory_space<vmem>>, %arg5: memref<128x128xbf16, #tpu.memory_space<vmem>>, %arg6: memref<1x128xf32, #tpu.memory_space<vmem>>, %arg7: memref<8x128xf32, #tpu.memory_space<vmem>>) attributes {dimension_semantics = [#tpu.dimension_semantics<parallel>], iteration_bounds = array<i64: 2>, scalar_prefetch = 0 : i64, scratch_operands = 0 : i64, tpu.core_type = #tpu.core_type<tc>, window_params = [{transform_indices = @transform_0, window_bounds = array<i64: 1, 8, 128>}, {transform_indices = @transform_1, window_bounds = array<i64: 8, 128>}, {pipeline_mode = #tpu.pipeline_mode<synchronous>, transform_indices = @transform_2, window_bounds = array<i64: 128, 128>}, {pipeline_mode = #tpu.pipeline_mode<synchronous>, transform_indices = @transform_3, window_bounds = array<i64: 1, 128>}, {pipeline_mode = #tpu.pipeline_mode<synchronous>, transform_indices = @transform_4, window_bounds = array<i64: 128, 128>}, {pipeline_mode = #tpu.pipeline_mode<synchronous>, transform_indices = @transform_5, window_bounds = array<i64: 1, 128>}, {transform_indices = @transform_6, window_bounds = array<i64: 8, 128>}]} {
    %c0 = arith.constant 0 : index
    %c0_0 = arith.constant 0 : index
    %c0_1 = arith.constant 0 : index
    %0 = vector.load %arg1[%c0, %c0_0, %c0_1] : memref<1x8x128xf32, #tpu.memory_space<vmem>>, vector<1x8x128xf32>
    %cst = arith.constant dense<0.000000e+00> : vector<1x128xf32>
    %1 = vector.multi_reduction <add>, %0, %cst [1] : vector<1x8x128xf32> to vector<1x128xf32>
    %cst_2 = arith.constant 8.000000e+00 : f32
    %2 = vector.broadcast %cst_2 : f32 to vector<1x128xf32>
    %3 = arith.divf %1, %2 : vector<1x128xf32>
    %c0_3 = arith.constant 0 : index
    %c0_4 = arith.constant 0 : index
    %4 = vector.load %arg2[%c0_3, %c0_4] : memref<8x128xbf16, #tpu.memory_space<vmem>>, vector<8x128xbf16>
    %c0_5 = arith.constant 0 : index
    %c0_6 = arith.constant 0 : index
    %5 = vector.load %arg3[%c0_5, %c0_6] : memref<128x128xbf16, #tpu.memory_space<vmem>>, vector<128x128xbf16>
    %cst_7 = arith.constant dense<0.000000e+00> : vector<8x128xf32>
    %6 = tpu.matmul %4, %5, %cst_7 {dimension_numbers = #tpu.dot_dimension_numbers<[1], [0], [0], [1], [0, 0, 1, 1], [], []>} : vector<8x128xbf16>, vector<128x128xbf16>, vector<8x128xf32> -> vector<8x128xf32>
    %c0_8 = arith.constant 0 : index
    %c0_9 = arith.constant 0 : index
    %7 = vector.load %arg4[%c0_8, %c0_9] : memref<1x128xf32, #tpu.memory_space<vmem>>, vector<1x128xf32>
    %8 = vector.broadcast %7 : vector<1x128xf32> to vector<8x128xf32>
    %9 = arith.addf %6, %8 : vector<8x128xf32>
    %cst_10 = arith.constant 0.000000e+00 : f32
    %10 = vector.broadcast %cst_10 : f32 to vector<8x128xf32>
    %11 = arith.maximumf %9, %10 : vector<8x128xf32>
    %12 = arith.truncf %11 : vector<8x128xf32> to vector<8x128xbf16>
    %c0_11 = arith.constant 0 : index
    %c0_12 = arith.constant 0 : index
    %13 = vector.load %arg5[%c0_11, %c0_12] : memref<128x128xbf16, #tpu.memory_space<vmem>>, vector<128x128xbf16>
    %cst_13 = arith.constant dense<0.000000e+00> : vector<8x128xf32>
    %14 = tpu.matmul %12, %13, %cst_13 {dimension_numbers = #tpu.dot_dimension_numbers<[1], [0], [0], [1], [0, 0, 1, 1], [], []>} : vector<8x128xbf16>, vector<128x128xbf16>, vector<8x128xf32> -> vector<8x128xf32>
    %c0_14 = arith.constant 0 : index
    %c0_15 = arith.constant 0 : index
    %15 = vector.load %arg6[%c0_14, %c0_15] : memref<1x128xf32, #tpu.memory_space<vmem>>, vector<1x128xf32>
    %16 = vector.broadcast %15 : vector<1x128xf32> to vector<8x128xf32>
    %17 = arith.addf %14, %16 : vector<8x128xf32>
    %18 = vector.shape_cast %17 : vector<8x128xf32> to vector<1x8x128xf32>
    %cst_16 = arith.constant dense<0.000000e+00> : vector<1x128xf32>
    %19 = vector.multi_reduction <add>, %18, %cst_16 [1] : vector<1x8x128xf32> to vector<1x128xf32>
    %20 = vector.shape_cast %19 : vector<1x128xf32> to vector<1x1x128xf32>
    %cst_17 = arith.constant 8.000000e+00 : f32
    %21 = vector.broadcast %cst_17 : f32 to vector<1x1x128xf32>
    %22 = arith.divf %20, %21 : vector<1x1x128xf32>
    %23 = vector.broadcast %22 : vector<1x1x128xf32> to vector<1x8x128xf32>
    %24 = arith.subf %18, %23 : vector<1x8x128xf32>
    %25 = vector.shape_cast %3 : vector<1x128xf32> to vector<1x1x128xf32>
    %26 = vector.broadcast %25 : vector<1x1x128xf32> to vector<1x8x128xf32>
    %27 = arith.addf %24, %26 : vector<1x8x128xf32>
    %28 = vector.shape_cast %27 : vector<1x8x128xf32> to vector<8x128xf32>
    %c0_18 = arith.constant 0 : index
    %c0_19 = arith.constant 0 : index
    %29 = vector.load %arg7[%c0_18, %c0_19] : memref<8x128xf32, #tpu.memory_space<vmem>>, vector<8x128xf32>
    tpu.vector_store %arg7[%c0_18, %c0_19], %28 {strides = array<i32>} : memref<8x128xf32, #tpu.memory_space<vmem>>, vector<8x128xf32>,
    return
  }
  func.func @transform_0(%arg0: i32) -> (i32, i32, i32) {
    %c0_i32 = arith.constant 0 : i32
    %c0_i32_0 = arith.constant 0 : i32
    %c0_i32_1 = arith.constant 0 : i32
    return %arg0, %c0_i32, %c0_i32_0 : i32, i32, i32
  }
  func.func @transform_1(%arg0: i32) -> (i32, i32) {
    %c0_i32 = arith.constant 0 : i32
    %c0_i32_0 = arith.constant 0 : i32
    return %arg0, %c0_i32 : i32, i32
  }
  func.func @transform_2(%arg0: i32) -> (i32, i32) {
    %c0_i32 = arith.constant 0 : i32
    %c0_i32_0 = arith.constant 0 : i32
    %c0_i32_1 = arith.constant 0 : i32
    return %c0_i32, %c0_i32_0 : i32, i32
  }
  func.func @transform_3(%arg0: i32) -> (i32, i32) {
    %c0_i32 = arith.constant 0 : i32
    %c0_i32_0 = arith.constant 0 : i32
    %c0_i32_1 = arith.constant 0 : i32
    return %c0_i32, %c0_i32_0 : i32, i32
  }
  func.func @transform_4(%arg0: i32) -> (i32, i32) {
    %c0_i32 = arith.constant 0 : i32
    %c0_i32_0 = arith.constant 0 : i32
    %c0_i32_1 = arith.constant 0 : i32
    return %c0_i32, %c0_i32_0 : i32, i32
  }
  func.func @transform_5(%arg0: i32) -> (i32, i32) {
    %c0_i32 = arith.constant 0 : i32
    %c0_i32_0 = arith.constant 0 : i32
    %c0_i32_1 = arith.constant 0 : i32
    return %c0_i32, %c0_i32_0 : i32, i32
  }
  func.func @transform_6(%arg0: i32) -> (i32, i32) {
    %c0_i32 = arith.constant 0 : i32
    %c0_i32_0 = arith.constant 0 : i32
    return %arg0, %c0_i32 : i32, i32
  }
}

</mosaic_0001>

<llo_original>
// kernel: tpu_custom_call.1
$region0: #{tpu_custom_call.1}
  #allocation0 [shape = 'u32[]', space=smem, size = 0x4, offset = 0x4, fixed_abs, tag = 'smem constant byte address 0x4 - core index']
  #allocation1 [shape = 'u32[144,128]{1,0:T(1,128)}', space=vmem, size = 0x12000, scoped, tag = 'internal scratch']
  %s0 = inlined_call_operand.hbm [shape: f32[2,8,128], index: 0, kind: input, shape index: {}]
  %s1 = inlined_call_operand.hbm [shape: bf16[16,128], index: 1, kind: input, shape index: {}]
  %s2 = inlined_call_operand.hbm [shape: bf16[128,128], index: 2, kind: input, shape index: {}]
  %s3 = inlined_call_operand.vmem [shape: f32[1,128], index: 3, kind: input, shape index: {}]
  %s4 = inlined_call_operand.hbm [shape: bf16[128,128], index: 4, kind: input, shape index: {}]
  %s5 = inlined_call_operand.vmem [shape: f32[1,128], index: 5, kind: input, shape index: {}]
  %s6 = inlined_call_operand.hbm [shape: f32[16,128], index: 6, kind: output, shape index: {}]
  %s7 = sld [smem:[#allocation0]]
  $region73: #{tpu_custom_call.1} parent=0
    _
  %s9 = ssub.s32 1, %s7
  %s10 = scalar_select 0, %s9, %s7
  $region1: #{tpu_custom_call.1} parent=0
    #allocation2 [shape = 'u8[8192]{0}', space=vmem, size = 0x2000, scoped, tag = 'input window, operand 0']
    #allocation3 [shape = 's32[2]{0}', space=sflag, size = 0x8, scoped, tag = 'scoped memory for tpu_custom_call.1']
    #allocation4 [shape = 's32[2]{0}', space=sflag, size = 0x8, scoped, tag = 'scoped memory for tpu_custom_call.1']
    #allocation5 [shape = 'u8[4096]{0}', space=vmem, size = 0x1000, scoped, tag = 'input window, operand 1']
    #allocation6 [shape = 's32[2]{0}', space=sflag, size = 0x8, scoped, tag = 'scoped memory for tpu_custom_call.1']
    #allocation7 [shape = 'u8[32768]{0}', space=vmem, size = 0x8000, scoped, tag = 'input window, operand 2, single buffered']
    #allocation8 [shape = 'u8[32768]{0}', space=vmem, size = 0x8000, scoped, tag = 'input window, operand 4, single buffered']
    #allocation9 [shape = 's32[1]{0}', space=sflag, size = 0x4, scoped, tag = 'scoped memory for tpu_custom_call.1']
    #allocation10 [shape = 'u8[8192]{0}', space=vmem, size = 0x2000, scoped, tag = 'output window, operand 0']
    %11 = vsyncpa [#allocation3], 0
    %s12 = scalar_lea.sflag [#allocation3], 1
    %13 = vsyncpa %s12, 0
    %14 = vsyncpa [#allocation6], 0
    %s15 = scalar_lea.sflag [#allocation6], 1
    %16 = vsyncpa %s15, 0
    %17 = vsyncpa [#allocation9], 0
    %18 = vsyncpa [#allocation4], 0
    %s19 = scalar_lea.sflag [#allocation4], 1
    %20 = vsyncpa %s19, 0
    loop: start=0, step=1, limit=4
    $region2: #{tpu_custom_call.1} parent=1 // loop_pre_header
      _
    $region3: #{tpu_custom_call.1} parent=1 // loop_header
      %s22 = sphi 0, %s26
      %p23 = scmp.ge.s32.totalorder %s22, 4
      %s32 = sphi 0, %s34
      %s35 = sphi 0, %s32
      %s36 = sphi 0, %s35
      %s52 = sphi 0, %s36
      %s58 = sphi 0, %s60
      %s61 = sphi 0, %s58
      %s62 = sphi 0, %s61
      %s78 = sphi 0, %s62
      %s82 = sphi 0, %s82
      %s84 = sphi 0, %s82
      %s85 = sphi 0, %s84
      %s99 = sphi 0, %s85
      %s103 = sphi 0, %s103
      %s105 = sphi 0, %s103
      %s106 = sphi 0, %s105
      %s120 = sphi 0, %s106
      %s124 = sphi 0, %s124
      %s126 = sphi 0, %s124
      %s127 = sphi 0, %s126
      %s141 = sphi 0, %s127
      %s145 = sphi 0, %s145
      %s147 = sphi 0, %s145
      %s148 = sphi 0, %s147
      %s162 = sphi 0, %s148
      %s168 = sphi 0, %s170
      %s171 = sphi 0, %s168
      %s172 = sphi 0, %s171
      %s188 = sphi 0, %s172
    $region4: #{tpu_custom_call.1} parent=1 // loop_header_branch
      %25 = sbr.rel (%p23) target = $region8
    $region5: #{tpu_custom_call.1} parent=1 // loop_body
      %s27 = ssub.s32 %s22, 1
      %s28 = ssub.s32 %s22, 2
      %s29 = sadd.s32 %s22, 1
      %s30 = ssub.s32 %s22, %s29
      %p31 = scmp.eq.s32.totalorder %s30, 0
      %s33 = sadd.s32 %s32, 1
      %s34 = scalar_select %p31, %s32, %s33
      %p37 = pneg %p31
      %p38 = scmp.eq.s32.totalorder %s22, 1
      %p39 = por %p37, %p38
      %p40 = scmp.ne.s32.totalorder %s32, %s35
      %p41 = scmp.eq.s32.totalorder %s22, 0
      %p42 = por %p40, %p41
      %p43 = scmp.ne.s32.totalorder %s32, %s35
      %p44 = scmp.eq.s32.totalorder %s27, 1
      %p45 = por %p43, %p44
      %p46 = scmp.ne.s32.totalorder %s35, %s36
      %p47 = scmp.eq.s32.totalorder %s27, 0
      %p48 = por %p46, %p47
      %p49 = scmp.ne.s32.totalorder %s35, %s36
      %p50 = scmp.eq.s32.totalorder %s28, 1
      %p51 = por %p49, %p50
      %p53 = scmp.ne.s32.totalorder %s36, %s52
      %p54 = scmp.eq.s32.totalorder %s28, 0
      %p55 = por %p53, %p54
      %s56 = ssub.s32 %s22, %s29
      %p57 = scmp.eq.s32.totalorder %s56, 0
      %s59 = sadd.s32 %s58, 1
      %s60 = scalar_select %p57, %s58, %s59
      %p63 = pneg %p57
      %p64 = scmp.eq.s32.totalorder %s22, 1
      %p65 = por %p63, %p64
      %p66 = scmp.ne.s32.totalorder %s58, %s61
      %p67 = scmp.eq.s32.totalorder %s22, 0
      %p68 = por %p66, %p67
      %p69 = scmp.ne.s32.totalorder %s58, %s61
      %p70 = scmp.eq.s32.totalorder %s27, 1
      %p71 = por %p69, %p70
      %p72 = scmp.ne.s32.totalorder %s61, %s62
      %p73 = scmp.eq.s32.totalorder %s27, 0
      %p74 = por %p72, %p73
      %p75 = scmp.ne.s32.totalorder %s61, %s62
      %p76 = scmp.eq.s32.totalorder %s28, 1
      %p77 = por %p75, %p76
      %p79 = scmp.ne.s32.totalorder %s62, %s78
      %p80 = scmp.eq.s32.totalorder %s28, 0
      %p81 = por %p79, %p80
      %s83 = sadd.s32 %s82, 1
      %p86 = scmp.eq.s32.totalorder %s22, 1
      %p87 = scmp.ne.s32.totalorder %s82, %s84
      %p88 = scmp.eq.s32.totalorder %s22, 0
      %p89 = por %p87, %p88
      %p90 = scmp.ne.s32.totalorder %s82, %s84
      %p91 = scmp.eq.s32.totalorder %s27, 1
      %p92 = por %p90, %p91
      %p93 = scmp.ne.s32.totalorder %s84, %s85
      %p94 = scmp.eq.s32.totalorder %s27, 0
      %p95 = por %p93, %p94
      %p96 = scmp.ne.s32.totalorder %s84, %s85
      %p97 = scmp.eq.s32.totalorder %s28, 1
      %p98 = por %p96, %p97
      %p100 = scmp.ne.s32.totalorder %s85, %s99
      %p101 = scmp.eq.s32.totalorder %s28, 0
      %p102 = por %p100, %p101
      %s104 = sadd.s32 %s103, 1
      %p107 = scmp.eq.s32.totalorder %s22, 1
      %p108 = scmp.ne.s32.totalorder %s103, %s105
      %p109 = scmp.eq.s32.totalorder %s22, 0
      %p110 = por %p108, %p109
      %p111 = scmp.ne.s32.totalorder %s103, %s105
      %p112 = scmp.eq.s32.totalorder %s27, 1
      %p113 = por %p111, %p112
      %p114 = scmp.ne.s32.totalorder %s105, %s106
      %p115 = scmp.eq.s32.totalorder %s27, 0
      %p116 = por %p114, %p115
      %p117 = scmp.ne.s32.totalorder %s105, %s106
      %p118 = scmp.eq.s32.totalorder %s28, 1
      %p119 = por %p117, %p118
      %p121 = scmp.ne.s32.totalorder %s106, %s120
      %p122 = scmp.eq.s32.totalorder %s28, 0
      %p123 = por %p121, %p122
      %s125 = sadd.s32 %s124, 1
      %p128 = scmp.eq.s32.totalorder %s22, 1
      %p129 = scmp.ne.s32.totalorder %s124, %s126
      %p130 = scmp.eq.s32.totalorder %s22, 0
      %p131 = por %p129, %p130
      %p132 = scmp.ne.s32.totalorder %s124, %s126
      %p133 = scmp.eq.s32.totalorder %s27, 1
      %p134 = por %p132, %p133
      %p135 = scmp.ne.s32.totalorder %s126, %s127
      %p136 = scmp.eq.s32.totalorder %s27, 0
      %p137 = por %p135, %p136
      %p138 = scmp.ne.s32.totalorder %s126, %s127
      %p139 = scmp.eq.s32.totalorder %s28, 1
      %p140 = por %p138, %p139
      %p142 = scmp.ne.s32.totalorder %s127, %s141
      %p143 = scmp.eq.s32.totalorder %s28, 0
      %p144 = por %p142, %p143
      %s146 = sadd.s32 %s145, 1
      %p149 = scmp.eq.s32.totalorder %s22, 1
      %p150 = scmp.ne.s32.totalorder %s145, %s147
      %p151 = scmp.eq.s32.totalorder %s22, 0
      %p152 = por %p150, %p151
      %p153 = scmp.ne.s32.totalorder %s145, %s147
      %p154 = scmp.eq.s32.totalorder %s27, 1
      %p155 = por %p153, %p154
      %p156 = scmp.ne.s32.totalorder %s147, %s148
      %p157 = scmp.eq.s32.totalorder %s27, 0
      %p158 = por %p156, %p157
      %p159 = scmp.ne.s32.totalorder %s147, %s148
      %p160 = scmp.eq.s32.totalorder %s28, 1
      %p161 = por %p159, %p160
      %p163 = scmp.ne.s32.totalorder %s148, %s162
      %p164 = scmp.eq.s32.totalorder %s28, 0
      %p165 = por %p163, %p164
      %s166 = ssub.s32 %s22, %s29
      %p167 = scmp.eq.s32.totalorder %s166, 0
      %s169 = sadd.s32 %s168, 1
      %s170 = scalar_select %p167, %s168, %s169
      %p173 = pneg %p167
      %p174 = scmp.eq.s32.totalorder %s22, 1
      %p175 = por %p173, %p174
      %p176 = scmp.ne.s32.totalorder %s168, %s171
      %p177 = scmp.eq.s32.totalorder %s22, 0
      %p178 = por %p176, %p177
      %p179 = scmp.ne.s32.totalorder %s168, %s171
      %p180 = scmp.eq.s32.totalorder %s27, 1
      %p181 = por %p179, %p180
      %p182 = scmp.ne.s32.totalorder %s171, %s172
      %p183 = scmp.eq.s32.totalorder %s27, 0
      %p184 = por %p182, %p183
      %p185 = scmp.ne.s32.totalorder %s171, %s172
      %p186 = scmp.eq.s32.totalorder %s28, 1
      %p187 = por %p185, %p186
      %p189 = scmp.ne.s32.totalorder %s172, %s188
      %p190 = scmp.eq.s32.totalorder %s28, 0
      %p191 = por %p189, %p190
      %p192 = scmp.le.s32.totalorder 1, %s22
      %p193 = scmp.lt.s32.totalorder %s22, 3
      %p194 = pnand %p192, %p193
      %p195 = pneg %p194
      // Predicated region
      $region9: #{tpu_custom_call.1} parent=5 // pred_check
        _
      $region10: #{tpu_custom_call.1} parent=5 // pred_check_branch
        %197 = sbr.rel (%p194) target = $region12
      $region11: #{tpu_custom_call.1} parent=5 // pred_region
        %s198 = ssub.s32 %s22, 1
        // Predicated region
        $region13: #{tpu_custom_call.1} parent=11 // pred_check
          %p199 = pneg %p95
        $region14: #{tpu_custom_call.1} parent=11 // pred_check_branch
          %201 = sbr.rel (%p199) target = $region16
        $region15: #{tpu_custom_call.1} parent=11 // pred_region
          %s203 = ssub.s32 1024, 1024
          %204 = vsyncadd [#allocation6], %s203
          %s205 = sshll.u32 [#allocation7], 4
          %s206 = int_to_ptr.vmem [resolvable:$true] %s205
          %211 = dma.hbm_to_vmem [thread:$0]  %s2, 1024, %s206, [#allocation6], 64, 64, 4
        $region16: #{tpu_custom_call.1} parent=11 // pred_fallthru
          _
        // Predicated region
        $region17: #{tpu_custom_call.1} parent=11 // pred_check
          %p212 = pneg %p116
        $region18: #{tpu_custom_call.1} parent=11 // pred_check_branch
          %214 = sbr.rel (%p212) target = $region20
        $region19: #{tpu_custom_call.1} parent=11 // pred_region
          _
        $region20: #{tpu_custom_call.1} parent=11 // pred_fallthru
          _
        // Predicated region
        $region21: #{tpu_custom_call.1} parent=11 // pred_check
          %p215 = pneg %p137
        $region22: #{tpu_custom_call.1} parent=11 // pred_check_branch
          %217 = sbr.rel (%p215) target = $region24
        $region23: #{tpu_custom_call.1} parent=11 // pred_region
          %s219 = ssub.s32 1024, 1024
          %220 = vsyncadd [#allocation9], %s219
          %s221 = sshll.u32 [#allocation8], 4
          %s222 = int_to_ptr.vmem [resolvable:$true] %s221
          %227 = dma.hbm_to_vmem [thread:$0]  %s4, 1024, %s222, [#allocation9], 64, 64, 4
        $region24: #{tpu_custom_call.1} parent=11 // pred_fallthru
          _
        // Predicated region
        $region25: #{tpu_custom_call.1} parent=11 // pred_check
          %p228 = pneg %p158
        $region26: #{tpu_custom_call.1} parent=11 // pred_check_branch
          %230 = sbr.rel (%p228) target = $region28
        $region27: #{tpu_custom_call.1} parent=11 // pred_region
          _
        $region28: #{tpu_custom_call.1} parent=11 // pred_fallthru
          _
      $region12: #{tpu_custom_call.1} parent=5 // pred_fallthru
        _
      %p231 = scmp.lt.s32.totalorder %s22, 2
      // Predicated region
      $region29: #{tpu_custom_call.1} parent=5 // pred_check
        %p232 = pneg %p231
      $region30: #{tpu_custom_call.1} parent=5 // pred_check_branch
        %234 = sbr.rel (%p232) target = $region32
      $region31: #{tpu_custom_call.1} parent=5 // pred_region
        // Predicated region
        $region33: #{tpu_custom_call.1} parent=31 // pred_check
          %p235 = pneg %p42
        $region34: #{tpu_custom_call.1} parent=31 // pred_check_branch
          %237 = sbr.rel (%p235) target = $region36
        $region35: #{tpu_custom_call.1} parent=31 // pred_region
          %s238 = sand.u32 %s32, 1
          %s239 = scalar_lea.sflag [#allocation3], %s238
          %s240 = sand.u32 %s32, 1
          %s241 = smul.addr %s240, 8
          %s242 = scalar_lea.vmem [#allocation2], %s241
          %s244 = ssub.s32 128, 128
          %245 = vsyncadd %s239, %s244
          %s246 = smul.addr %s22, 128
          %s247 = scalar_lea.hbm %s0, %s246
          %s249 = sshll.u32 %s242, 4
          %s250 = int_to_ptr.vmem [resolvable:$true] %s249
          %252 = dma.hbm_to_vmem [thread:$0]  %s247, 128, %s250, %s239
        $region36: #{tpu_custom_call.1} parent=31 // pred_fallthru
          _
        // Predicated region
        $region37: #{tpu_custom_call.1} parent=31 // pred_check
          %p253 = pneg %p68
        $region38: #{tpu_custom_call.1} parent=31 // pred_check_branch
          %255 = sbr.rel (%p253) target = $region40
        $region39: #{tpu_custom_call.1} parent=31 // pred_region
          %s256 = sand.u32 %s22, 1
          %s257 = scalar_lea.sflag [#allocation6], %s256
          %s258 = sand.u32 %s58, 1
          %s259 = smul.addr %s258, 4
          %s260 = scalar_lea.vmem [#allocation5], %s259
          %s262 = ssub.s32 64, 64
          %263 = vsyncadd %s257, %s262
          %s264 = smul.addr %s22, 64
          %s265 = scalar_lea.hbm %s1, %s264
          %s267 = sshll.u32 %s260, 4
          %s268 = int_to_ptr.vmem [resolvable:$true] %s267
          %270 = dma.hbm_to_vmem [thread:$0]  %s265, 64, %s268, %s257
        $region40: #{tpu_custom_call.1} parent=31 // pred_fallthru
          _
      $region32: #{tpu_custom_call.1} parent=5 // pred_fallthru
        _
      %p271 = scmp.le.s32.totalorder 1, %s22
      %p272 = scmp.lt.s32.totalorder %s22, 3
      %p273 = pnand %p271, %p272
      %p274 = pneg %p273
      // Predicated region
      $region41: #{tpu_custom_call.1} parent=5 // pred_check
        _
      $region42: #{tpu_custom_call.1} parent=5 // pred_check_branch
        %276 = sbr.rel (%p273) target = $region44
      $region43: #{tpu_custom_call.1} parent=5 // pred_region
        %s277 = ssub.s32 %s22, 1
        %s278 = sand.u32 %s35, 1
        %s279 = scalar_lea.sflag [#allocation3], %s278
        %s280 = sand.u32 %s35, 1
        %s281 = smul.addr %s280, 8
        %s282 = scalar_lea.vmem [#allocation2], %s281
        // Predicated region
        $region45: #{tpu_custom_call.1} parent=43 // pred_check
          %p283 = pneg %p48
        $region46: #{tpu_custom_call.1} parent=43 // pred_check_branch
          %285 = sbr.rel (%p283) target = $region48
        $region47: #{tpu_custom_call.1} parent=43 // pred_region
          %286 = dma.done %s279, 128
        $region48: #{tpu_custom_call.1} parent=43 // pred_fallthru
          _
        %s287 = sand.u32 %s27, 1
        %s288 = scalar_lea.sflag [#allocation6], %s287
        %s289 = sand.u32 %s61, 1
        %s290 = smul.addr %s289, 4
        %s291 = scalar_lea.vmem [#allocation5], %s290
        // Predicated region
        $region49: #{tpu_custom_call.1} parent=43 // pred_check
          %p292 = pneg %p74
        $region50: #{tpu_custom_call.1} parent=43 // pred_check_branch
          %294 = sbr.rel (%p292) target = $region52
        $region51: #{tpu_custom_call.1} parent=43 // pred_region
          %295 = dma.done %s288, 64
        $region52: #{tpu_custom_call.1} parent=43 // pred_fallthru
          _
        // Predicated region
        $region53: #{tpu_custom_call.1} parent=43 // pred_check
          %p296 = pneg %p95
        $region54: #{tpu_custom_call.1} parent=43 // pred_check_branch
          %298 = sbr.rel (%p296) target = $region56
        $region55: #{tpu_custom_call.1} parent=43 // pred_region
          %299 = dma.done [#allocation6], 1024
        $region56: #{tpu_custom_call.1} parent=43 // pred_fallthru
          _
        // Predicated region
        $region57: #{tpu_custom_call.1} parent=43 // pred_check
          %p300 = pneg %p137
        $region58: #{tpu_custom_call.1} parent=43 // pred_check_branch
          %302 = sbr.rel (%p300) target = $region60
        $region59: #{tpu_custom_call.1} parent=43 // pred_region
          %303 = dma.done [#allocation9], 1024
        $region60: #{tpu_custom_call.1} parent=43 // pred_fallthru
          _
        %s304 = sand.u32 %s35, 1
        %s305 = scalar_lea.sflag [#allocation3], %s304
        %s306 = sand.u32 %s35, 1
        %s307 = smul.addr %s306, 8
        %s308 = scalar_lea.vmem [#allocation2], %s307
        %p309 = pneg %p48
        %p310 = pneg %p45
        %s311 = sand.u32 %s27, 1
        %s312 = scalar_lea.sflag [#allocation6], %s311
        %s313 = sand.u32 %s61, 1
        %s314 = smul.addr %s313, 4
        %s315 = scalar_lea.vmem [#allocation5], %s314
        %p316 = pneg %p74
        %p317 = pneg %p71
        %p318 = pneg %p95
        %p319 = pneg %p92
        %p320 = pneg %p116
        %p321 = pneg %p113
        %p322 = pneg %p137
        %p323 = pneg %p134
        %p324 = pneg %p158
        %p325 = pneg %p155
        %p326 = pneg %p184
        %p327 = pneg %p181
        %s328 = sand.u32 %s171, 1
        %s329 = scalar_lea.sflag [#allocation4], %s328
        %s330 = sand.u32 %s171, 1
        %s331 = smul.addr %s330, 8
        %s332 = scalar_lea.vmem [#allocation10], %s331
        %v334 = vld [vmem:[%s282] sm:$0xff]
        %v335 = vrot.slane %v334, 4
        %v336 = vadd.f32 %v334, %v335
        %v337 = vrot.slane %v336, 2
        %v338 = vadd.f32 %v336, %v337
        %v339 = vrot.slane %v338, 1
        %v340 = vadd.f32 %v338, %v339
        %v341 = vrcp.pop 8.0
        %v342 = vmul.f32 %v340, %v341
        %v343 = vld [vmem:[%s291] sm:$0xf]
        %v344 = vld [vmem:[#allocation7] sm:$0xf]
        %v345 = vld [vmem:[#allocation7 + $0x4] sm:$0xf]
        %v346 = vld [vmem:[#allocation7 + $0x8] sm:$0xf]
        %v347 = vld [vmem:[#allocation7 + $0xc] sm:$0xf]
        %v348 = vld [vmem:[#allocation7 + $0x10] sm:$0xf]
        %v349 = vld [vmem:[#allocation7 + $0x14] sm:$0xf]
        %v350 = vld [vmem:[#allocation7 + $0x18] sm:$0xf]
        %v351 = vld [vmem:[#allocation7 + $0x1c] sm:$0xf]
        %v352 = vld [vmem:[#allocation7 + $0x20] sm:$0xf]
        %v353 = vld [vmem:[#allocation7 + $0x24] sm:$0xf]
        %v354 = vld [vmem:[#allocation7 + $0x28] sm:$0xf]
        %v355 = vld [vmem:[#allocation7 + $0x2c] sm:$0xf]
        %v356 = vld [vmem:[#allocation7 + $0x30] sm:$0xf]
        %v357 = vld [vmem:[#allocation7 + $0x34] sm:$0xf]
        %v358 = vld [vmem:[#allocation7 + $0x38] sm:$0xf]
        %v359 = vld [vmem:[#allocation7 + $0x3c] sm:$0xf]
        %v360 = vld [vmem:[%s3] sm:$0x1]
        %v362 = vlaneseq
        %v363 = vshrl.u32 %v362, 7
        %v364 = vsub.s32 0, %v363
        %v365 = vrot.slane %v360, %v364
        %v383 = vunpack.c.l.b16 %v344
        %v384 = vunpack.c.l.b16 %v345
        %v385 = vunpack.c.l.b16 %v346
        %v386 = vunpack.c.l.b16 %v347
        %v387 = vunpack.c.l.b16 %v348
        %v388 = vunpack.c.l.b16 %v349
        %v389 = vunpack.c.l.b16 %v350
        %v390 = vunpack.c.l.b16 %v351
        %v391 = vunpack.c.l.b16 %v352
        %v392 = vunpack.c.l.b16 %v353
        %v393 = vunpack.c.l.b16 %v354
        %v394 = vunpack.c.l.b16 %v355
        %v395 = vunpack.c.l.b16 %v356
        %v396 = vunpack.c.l.b16 %v357
        %v397 = vunpack.c.l.b16 %v358
        %v398 = vunpack.c.l.b16 %v359
        %v399 = vpack.c.b16 %v384, %v383
        %v400 = vpack.c.b16 %v386, %v385
        %v401 = vpack.c.b16 %v388, %v387
        %v402 = vpack.c.b16 %v390, %v389
        %v403 = vpack.c.b16 %v392, %v391
        %v404 = vpack.c.b16 %v394, %v393
        %v405 = vpack.c.b16 %v396, %v395
        %v406 = vpack.c.b16 %v398, %v397
        %415 = vmatprep.subr.bf16.mxu0 0
        %416 = vmatpush1.bf16.msra.mxu0 %v399
        %417 = vmatprep.subr.bf16.mxu0 0
        %418 = vmatpush1.bf16.msra.mxu0 %v400
        %419 = vmatprep.subr.bf16.mxu0 0
        %420 = vmatpush1.bf16.msra.mxu0 %v401
        %421 = vmatprep.subr.bf16.mxu0 0
        %422 = vmatpush1.bf16.msra.mxu0 %v402
        %423 = vmatprep.subr.bf16.mxu0 0
        %424 = vmatpush1.bf16.msra.mxu0 %v403
        %425 = vmatprep.subr.bf16.mxu0 0
        %426 = vmatpush1.bf16.msra.mxu0 %v404
        %427 = vmatprep.subr.bf16.mxu0 0
        %428 = vmatpush1.bf16.msra.mxu0 %v405
        %429 = vmatprep.subr.bf16.mxu0 0
        %430 = vmatpush1.bf16.msra.mxu0 %v406
        %431 = vmatprep.subr.bf16.mxu0 0
        %432 = vmatpush1.bf16.msra.mxu0 0
        %433 = vmatprep.subr.bf16.mxu0 0
        %434 = vmatpush1.bf16.msra.mxu0 0
        %435 = vmatprep.subr.bf16.mxu0 0
        %436 = vmatpush1.bf16.msra.mxu0 0
        %437 = vmatprep.subr.bf16.mxu0 0
        %438 = vmatpush1.bf16.msra.mxu0 0
        %439 = vmatprep.subr.bf16.mxu0 0
        %440 = vmatpush1.bf16.msra.mxu0 0
        %441 = vmatprep.subr.bf16.mxu0 0
        %442 = vmatpush1.bf16.msra.mxu0 0
        %443 = vmatprep.subr.bf16.mxu0 0
        %444 = vmatpush1.bf16.msra.mxu0 0
        %445 = vmatprep.subr.bf16.mxu0 0
        %446 = vmatpush1.bf16.msra.mxu0 0
        %447 = vmatprep.mubr.bf16.mxu0 0
        %448 = vmatmul.mubr.bf16.gmra.mrb[0].mxu0 %v343
        %v449 = vpop.f32.mrb[0].mxu0
        %v450 = vadd.f32 %v365, %v449
        %v451 = vpop.f32.mrb[0].mxu0
        %v452 = vpop.f32.mrb[0].mxu0
        %v453 = vpop.f32.mrb[0].mxu0
        %454 = vdwg.mxu0
        %v455 = vmax.f32 %v450, 0.0
        %v456 = vpack.c.bf16 %v455, %v455
        %v457 = vld [vmem:[#allocation8] sm:$0xf]
        %v458 = vld [vmem:[#allocation8 + $0x4] sm:$0xf]
        %v459 = vld [vmem:[#allocation8 + $0x8] sm:$0xf]
        %v460 = vld [vmem:[#allocation8 + $0xc] sm:$0xf]
        %v461 = vld [vmem:[#allocation8 + $0x10] sm:$0xf]
        %v462 = vld [vmem:[#allocation8 + $0x14] sm:$0xf]
        %v463 = vld [vmem:[#allocation8 + $0x18] sm:$0xf]
        %v464 = vld [vmem:[#allocation8 + $0x1c] sm:$0xf]
        %v465 = vld [vmem:[#allocation8 + $0x20] sm:$0xf]
        %v466 = vld [vmem:[#allocation8 + $0x24] sm:$0xf]
        %v467 = vld [vmem:[#allocation8 + $0x28] sm:$0xf]
        %v468 = vld [vmem:[#allocation8 + $0x2c] sm:$0xf]
        %v469 = vld [vmem:[#allocation8 + $0x30] sm:$0xf]
        %v470 = vld [vmem:[#allocation8 + $0x34] sm:$0xf]
        %v471 = vld [vmem:[#allocation8 + $0x38] sm:$0xf]
        %v472 = vld [vmem:[#allocation8 + $0x3c] sm:$0xf]
        %v473 = vld [vmem:[%s5] sm:$0x1]
        %v475 = vlaneseq
        %v476 = vshrl.u32 %v475, 7
        %v477 = vsub.s32 0, %v476
        %v478 = vrot.slane %v473, %v477
        %v496 = vunpack.c.l.b16 %v457
        %v497 = vunpack.c.l.b16 %v458
        %v498 = vunpack.c.l.b16 %v459
        %v499 = vunpack.c.l.b16 %v460
        %v500 = vunpack.c.l.b16 %v461
        %v501 = vunpack.c.l.b16 %v462
        %v502 = vunpack.c.l.b16 %v463
        %v503 = vunpack.c.l.b16 %v464
        %v504 = vunpack.c.l.b16 %v465
        %v505 = vunpack.c.l.b16 %v466
        %v506 = vunpack.c.l.b16 %v467
        %v507 = vunpack.c.l.b16 %v468
        %v508 = vunpack.c.l.b16 %v469
        %v509 = vunpack.c.l.b16 %v470
        %v510 = vunpack.c.l.b16 %v471
        %v511 = vunpack.c.l.b16 %v472
        %v512 = vpack.c.b16 %v497, %v496
        %v513 = vpack.c.b16 %v499, %v498
        %v514 = vpack.c.b16 %v501, %v500
        %v515 = vpack.c.b16 %v503, %v502
        %v516 = vpack.c.b16 %v505, %v504
        %v517 = vpack.c.b16 %v507, %v506
        %v518 = vpack.c.b16 %v509, %v508
        %v519 = vpack.c.b16 %v511, %v510
        %528 = vmatprep.subr.bf16.mxu0 0
        %529 = vmatpush1.bf16.msra.mxu0 %v512
        %530 = vmatprep.subr.bf16.mxu0 0
        %531 = vmatpush1.bf16.msra.mxu0 %v513
        %532 = vmatprep.subr.bf16.mxu0 0
        %533 = vmatpush1.bf16.msra.mxu0 %v514
        %534 = vmatprep.subr.bf16.mxu0 0
        %535 = vmatpush1.bf16.msra.mxu0 %v515
        %536 = vmatprep.subr.bf16.mxu0 0
        %537 = vmatpush1.bf16.msra.mxu0 %v516
        %538 = vmatprep.subr.bf16.mxu0 0
        %539 = vmatpush1.bf16.msra.mxu0 %v517
        %540 = vmatprep.subr.bf16.mxu0 0
        %541 = vmatpush1.bf16.msra.mxu0 %v518
        %542 = vmatprep.subr.bf16.mxu0 0
        %543 = vmatpush1.bf16.msra.mxu0 %v519
        %544 = vmatprep.subr.bf16.mxu0 0
        %545 = vmatpush1.bf16.msra.mxu0 0
        %546 = vmatprep.subr.bf16.mxu0 0
        %547 = vmatpush1.bf16.msra.mxu0 0
        %548 = vmatprep.subr.bf16.mxu0 0
        %549 = vmatpush1.bf16.msra.mxu0 0
        %550 = vmatprep.subr.bf16.mxu0 0
        %551 = vmatpush1.bf16.msra.mxu0 0
        %552 = vmatprep.subr.bf16.mxu0 0
        %553 = vmatpush1.bf16.msra.mxu0 0
        %554 = vmatprep.subr.bf16.mxu0 0
        %555 = vmatpush1.bf16.msra.mxu0 0
        %556 = vmatprep.subr.bf16.mxu0 0
        %557 = vmatpush1.bf16.msra.mxu0 0
        %558 = vmatprep.subr.bf16.mxu0 0
        %559 = vmatpush1.bf16.msra.mxu0 0
        %560 = vmatprep.mubr.bf16.mxu0 0
        %561 = vmatmul.mubr.bf16.gmra.mrb[0].mxu0 %v456
        %v562 = vpop.f32.mrb[0].mxu0
        %v563 = vadd.f32 %v478, %v562
        %v564 = vpop.f32.mrb[0].mxu0
        %v565 = vpop.f32.mrb[0].mxu0
        %v566 = vpop.f32.mrb[0].mxu0
        %567 = vdwg.mxu0
        %v568 = vrot.slane %v563, 4
        %v569 = vadd.f32 %v563, %v568
        %v570 = vrot.slane %v569, 2
        %v571 = vadd.f32 %v569, %v570
        %v572 = vrot.slane %v571, 1
        %v573 = vadd.f32 %v571, %v572
        %v574 = vmul.f32 %v573, %v341
        %v575 = vsub.f32 %v563, %v574
        %v576 = vadd.f32 %v575, %v342
        %577 = vst [vmem:[%s332] sm:$0xff] %v576
        %s578 = sand.u32 %s171, 1
        %s579 = scalar_lea.sflag [#allocation4], %s578
        %s580 = sand.u32 %s171, 1
        %s581 = smul.addr %s580, 8
        %s582 = scalar_lea.vmem [#allocation10], %s581
        // Predicated region
        $region61: #{tpu_custom_call.1} parent=43 // pred_check
          %p583 = pneg %p181
        $region62: #{tpu_custom_call.1} parent=43 // pred_check_branch
          %585 = sbr.rel (%p583) target = $region64
        $region63: #{tpu_custom_call.1} parent=43 // pred_region
          %s587 = ssub.s32 128, 128
          %588 = vsyncadd %s579, %s587
          %s589 = smul.addr %s27, 128
          %s590 = scalar_lea.hbm %s6, %s589
          %s592 = sshll.u32 %s582, 4
          %s593 = int_to_ptr.vmem [resolvable:$true] %s592
          %595 = dma.vmem_to_hbm [thread:$0]  %s593, 128, %s590, %s579
        $region64: #{tpu_custom_call.1} parent=43 // pred_fallthru
          _
      $region44: #{tpu_custom_call.1} parent=5 // pred_fallthru
        _
      %p596 = scmp.le.s32.totalorder 2, %s22
      // Predicated region
      $region65: #{tpu_custom_call.1} parent=5 // pred_check
        %p597 = pneg %p596
      $region66: #{tpu_custom_call.1} parent=5 // pred_check_branch
        %599 = sbr.rel (%p597) target = $region68
      $region67: #{tpu_custom_call.1} parent=5 // pred_region
        %s600 = ssub.s32 %s22, 2
        // Predicated region
        $region69: #{tpu_custom_call.1} parent=67 // pred_check
          %p601 = pneg %p187
        $region70: #{tpu_custom_call.1} parent=67 // pred_check_branch
          %603 = sbr.rel (%p601) target = $region72
        $region71: #{tpu_custom_call.1} parent=67 // pred_region
          %s604 = sand.u32 %s172, 1
          %s605 = scalar_lea.sflag [#allocation4], %s604
          %s606 = sand.u32 %s172, 1
          %s607 = smul.addr %s606, 8
          %s608 = scalar_lea.vmem [#allocation10], %s607
          %609 = dma.done %s605, 128
        $region72: #{tpu_custom_call.1} parent=67 // pred_fallthru
          _
      $region68: #{tpu_custom_call.1} parent=5 // pred_fallthru
        _
    $region6: #{tpu_custom_call.1} parent=1 // loop_footer
      %s26 = sadd.s32 1, %s22
    $region7: #{tpu_custom_call.1} parent=1 // loop_footer_branch
      %21 = sbr.rel target = $region3
    $region8: #{tpu_custom_call.1} parent=1 // loop_exit
      _
    %610 = vsyncpa [#allocation3], 1
    %s611 = scalar_lea.sflag [#allocation3], 1
    %612 = vsyncpa %s611, 1
    %613 = vsyncpa [#allocation6], 1
    %s614 = scalar_lea.sflag [#allocation6], 1
    %615 = vsyncpa %s614, 1
    %616 = vsyncpa [#allocation9], 1
    %617 = vsyncpa [#allocation4], 1
    %s618 = scalar_lea.sflag [#allocation4], 1
    %619 = vsyncpa %s618, 1

// kernel: tpu_custom_call.1
$region0: #{tpu_custom_call.1}
  #allocation0 [shape = 'u32[]', space=smem, size = 0x4, offset = 0x4, fixed_abs, tag = 'smem constant byte address 0x4 - core index']
  #allocation1 [shape = 'u32[144,128]{1,0:T(1,128)}', space=vmem, size = 0x12000, scoped, tag = 'internal scratch']
  %s0 = inlined_call_operand.hbm [shape: f32[2,8,128], index: 0, kind: input, shape index: {}]
  %s1 = inlined_call_operand.hbm [shape: bf16[16,128], index: 1, kind: input, shape index: {}]
  %s2 = inlined_call_operand.hbm [shape: bf16[128,128], index: 2, kind: input, shape index: {}]
  %s3 = inlined_call_operand.vmem [shape: f32[1,128], index: 3, kind: input, shape index: {}]
  %s4 = inlined_call_operand.hbm [shape: bf16[128,128], index: 4, kind: input, shape index: {}]
  %s5 = inlined_call_operand.vmem [shape: f32[1,128], index: 5, kind: input, shape index: {}]
  %s6 = inlined_call_operand.hbm [shape: f32[16,128], index: 6, kind: output, shape index: {}]
  %s7 = sld [smem:[#allocation0]]
  $region73: #{tpu_custom_call.1} parent=0
    _
  %s9 = ssub.s32 1, %s7
  %s10 = scalar_select 0, %s9, %s7
  $region1: #{tpu_custom_call.1} parent=0
    #allocation2 [shape = 'u8[8192]{0}', space=vmem, size = 0x2000, scoped, tag = 'input window, operand 0']
    #allocation3 [shape = 's32[2]{0}', space=sflag, size = 0x8, scoped, tag = 'scoped memory for tpu_custom_call.1']
    #allocation4 [shape = 's32[2]{0}', space=sflag, size = 0x8, scoped, tag = 'scoped memory for tpu_custom_call.1']
    #allocation5 [shape = 'u8[4096]{0}', space=vmem, size = 0x1000, scoped, tag = 'input window, operand 1']
    #allocation6 [shape = 's32[2]{0}', space=sflag, size = 0x8, scoped, tag = 'scoped memory for tpu_custom_call.1']
    #allocation7 [shape = 'u8[32768]{0}', space=vmem, size = 0x8000, scoped, tag = 'input window, operand 2, single buffered']
    #allocation8 [shape = 'u8[32768]{0}', space=vmem, size = 0x8000, scoped, tag = 'input window, operand 4, single buffered']
    #allocation9 [shape = 's32[1]{0}', space=sflag, size = 0x4, scoped, tag = 'scoped memory for tpu_custom_call.1']
    #allocation10 [shape = 'u8[8192]{0}', space=vmem, size = 0x2000, scoped, tag = 'output window, operand 0']
    %11 = vsyncpa [#allocation3], 0
    %s12 = scalar_lea.sflag [#allocation3], 1
    %13 = vsyncpa %s12, 0
    %14 = vsyncpa [#allocation6], 0
    %s15 = scalar_lea.sflag [#allocation6], 1
    %16 = vsyncpa %s15, 0
    %17 = vsyncpa [#allocation9], 0
    %18 = vsyncpa [#allocation4], 0
    %s19 = scalar_lea.sflag [#allocation4], 1
    %20 = vsyncpa %s19, 0
    loop: start=0, step=1, limit=4
    $region2: #{tpu_custom_call.1} parent=1 // loop_pre_header
      _
    $region3: #{tpu_custom_call.1} parent=1 // loop_header
      %s22 = sphi 0, %s26
      %p23 = scmp.ge.s32.totalorder %s22, 4
      %s32 = sphi 0, %s34
      %s35 = sphi 0, %s32
      %s36 = sphi 0, %s35
      %s52 = sphi 0, %s36
      %s58 = sphi 0, %s60
      %s61 = sphi 0, %s58
      %s62 = sphi 0, %s61
      %s78 = sphi 0, %s62
      %s82 = sphi 0, %s82
      %s84 = sphi 0, %s82
      %s85 = sphi 0, %s84
      %s99 = sphi 0, %s85
      %s103 = sphi 0, %s103
      %s105 = sphi 0, %s103
      %s106 = sphi 0, %s105
      %s120 = sphi 0, %s106
      %s124 = sphi 0, %s124
      %s126 = sphi 0, %s124
      %s127 = sphi 0, %s126
      %s141 = sphi 0, %s127
      %s145 = sphi 0, %s145
      %s147 = sphi 0, %s145
      %s148 = sphi 0, %s147
      %s162 = sphi 0, %s148
      %s168 = sphi 0, %s170
      %s171 = sphi 0, %s168
      %s172 = sphi 0, %s171
      %s188 = sphi 0, %s172
    $region4: #{tpu_custom_call.1} parent=1 // loop_header_branch
      %25 = sbr.rel (%p23) target = $region8
    $region5: #{tpu_custom_call.1} parent=1 // loop_body
      %s27 = ssub.s32 %s22, 1
      %s28 = ssub.s32 %s22, 2
      %s29 = sadd.s32 %s22, 1
      %s30 = ssub.s32 %s22, %s29
      %p31 = scmp.eq.s32.totalorder %s30, 0
      %s33 = sadd.s32 %s32, 1
      %s34 = scalar_select %p31, %s32, %s33
      %p37 = pneg %p31
      %p38 = scmp.eq.s32.totalorder %s22, 1
      %p39 = por %p37, %p38
      %p40 = scmp.ne.s32.totalorder %s32, %s35
      %p41 = scmp.eq.s32.totalorder %s22, 0
      %p42 = por %p40, %p41
      %p43 = scmp.ne.s32.totalorder %s32, %s35
      %p44 = scmp.eq.s32.totalorder %s27, 1
      %p45 = por %p43, %p44
      %p46 = scmp.ne.s32.totalorder %s35, %s36
      %p47 = scmp.eq.s32.totalorder %s27, 0
      %p48 = por %p46, %p47
      %p49 = scmp.ne.s32.totalorder %s35, %s36
      %p50 = scmp.eq.s32.totalorder %s28, 1
      %p51 = por %p49, %p50
      %p53 = scmp.ne.s32.totalorder %s36, %s52
      %p54 = scmp.eq.s32.totalorder %s28, 0
      %p55 = por %p53, %p54
      %s56 = ssub.s32 %s22, %s29
      %p57 = scmp.eq.s32.totalorder %s56, 0
      %s59 = sadd.s32 %s58, 1
      %s60 = scalar_select %p57, %s58, %s59
      %p63 = pneg %p57
      %p64 = scmp.eq.s32.totalorder %s22, 1
      %p65 = por %p63, %p64
      %p66 = scmp.ne.s32.totalorder %s58, %s61
      %p67 = scmp.eq.s32.totalorder %s22, 0
      %p68 = por %p66, %p67
      %p69 = scmp.ne.s32.totalorder %s58, %s61
      %p70 = scmp.eq.s32.totalorder %s27, 1
      %p71 = por %p69, %p70
      %p72 = scmp.ne.s32.totalorder %s61, %s62
      %p73 = scmp.eq.s32.totalorder %s27, 0
      %p74 = por %p72, %p73
      %p75 = scmp.ne.s32.totalorder %s61, %s62
      %p76 = scmp.eq.s32.totalorder %s28, 1
      %p77 = por %p75, %p76
      %p79 = scmp.ne.s32.totalorder %s62, %s78
      %p80 = scmp.eq.s32.totalorder %s28, 0
      %p81 = por %p79, %p80
      %s83 = sadd.s32 %s82, 1
      %p86 = scmp.eq.s32.totalorder %s22, 1
      %p87 = scmp.ne.s32.totalorder %s82, %s84
      %p88 = scmp.eq.s32.totalorder %s22, 0
      %p89 = por %p87, %p88
      %p90 = scmp.ne.s32.totalorder %s82, %s84
      %p91 = scmp.eq.s32.totalorder %s27, 1
      %p92 = por %p90, %p91
      %p93 = scmp.ne.s32.totalorder %s84, %s85
      %p94 = scmp.eq.s32.totalorder %s27, 0
      %p95 = por %p93, %p94
      %p96 = scmp.ne.s32.totalorder %s84, %s85
      %p97 = scmp.eq.s32.totalorder %s28, 1
      %p98 = por %p96, %p97
      %p100 = scmp.ne.s32.totalorder %s85, %s99
      %p101 = scmp.eq.s32.totalorder %s28, 0
      %p102 = por %p100, %p101
      %s104 = sadd.s32 %s103, 1
      %p107 = scmp.eq.s32.totalorder %s22, 1
      %p108 = scmp.ne.s32.totalorder %s103, %s105
      %p109 = scmp.eq.s32.totalorder %s22, 0
      %p110 = por %p108, %p109
      %p111 = scmp.ne.s32.totalorder %s103, %s105
      %p112 = scmp.eq.s32.totalorder %s27, 1
      %p113 = por %p111, %p112
      %p114 = scmp.ne.s32.totalorder %s105, %s106
      %p115 = scmp.eq.s32.totalorder %s27, 0
      %p116 = por %p114, %p115
      %p117 = scmp.ne.s32.totalorder %s105, %s106
      %p118 = scmp.eq.s32.totalorder %s28, 1
      %p119 = por %p117, %p118
      %p121 = scmp.ne.s32.totalorder %s106, %s120
      %p122 = scmp.eq.s32.totalorder %s28, 0
      %p123 = por %p121, %p122
      %s125 = sadd.s32 %s124, 1
      %p128 = scmp.eq.s32.totalorder %s22, 1
      %p129 = scmp.ne.s32.totalorder %s124, %s126
      %p130 = scmp.eq.s32.totalorder %s22, 0
      %p131 = por %p129, %p130
      %p132 = scmp.ne.s32.totalorder %s124, %s126
      %p133 = scmp.eq.s32.totalorder %s27, 1
      %p134 = por %p132, %p133
      %p135 = scmp.ne.s32.totalorder %s126, %s127
      %p136 = scmp.eq.s32.totalorder %s27, 0
      %p137 = por %p135, %p136
      %p138 = scmp.ne.s32.totalorder %s126, %s127
      %p139 = scmp.eq.s32.totalorder %s28, 1
      %p140 = por %p138, %p139
      %p142 = scmp.ne.s32.totalorder %s127, %s141
      %p143 = scmp.eq.s32.totalorder %s28, 0
      %p144 = por %p142, %p143
      %s146 = sadd.s32 %s145, 1
      %p149 = scmp.eq.s32.totalorder %s22, 1
      %p150 = scmp.ne.s32.totalorder %s145, %s147
      %p151 = scmp.eq.s32.totalorder %s22, 0
      %p152 = por %p150, %p151
      %p153 = scmp.ne.s32.totalorder %s145, %s147
      %p154 = scmp.eq.s32.totalorder %s27, 1
      %p155 = por %p153, %p154
      %p156 = scmp.ne.s32.totalorder %s147, %s148
      %p157 = scmp.eq.s32.totalorder %s27, 0
      %p158 = por %p156, %p157
      %p159 = scmp.ne.s32.totalorder %s147, %s148
      %p160 = scmp.eq.s32.totalorder %s28, 1
      %p161 = por %p159, %p160
      %p163 = scmp.ne.s32.totalorder %s148, %s162
      %p164 = scmp.eq.s32.totalorder %s28, 0
      %p165 = por %p163, %p164
      %s166 = ssub.s32 %s22, %s29
      %p167 = scmp.eq.s32.totalorder %s166, 0
      %s169 = sadd.s32 %s168, 1
      %s170 = scalar_select %p167, %s168, %s169
      %p173 = pneg %p167
      %p174 = scmp.eq.s32.totalorder %s22, 1
      %p175 = por %p173, %p174
      %p176 = scmp.ne.s32.totalorder %s168, %s171
      %p177 = scmp.eq.s32.totalorder %s22, 0
      %p178 = por %p176, %p177
      %p179 = scmp.ne.s32.totalorder %s168, %s171
      %p180 = scmp.eq.s32.totalorder %s27, 1
      %p181 = por %p179, %p180
      %p182 = scmp.ne.s32.totalorder %s171, %s172
      %p183 = scmp.eq.s32.totalorder %s27, 0
      %p184 = por %p182, %p183
      %p185 = scmp.ne.s32.totalorder %s171, %s172
      %p186 = scmp.eq.s32.totalorder %s28, 1
      %p187 = por %p185, %p186
      %p189 = scmp.ne.s32.totalorder %s172, %s188
      %p190 = scmp.eq.s32.totalorder %s28, 0
      %p191 = por %p189, %p190
      %p192 = scmp.le.s32.totalorder 1, %s22
      %p193 = scmp.lt.s32.totalorder %s22, 3
      %p194 = pnand %p192, %p193
      %p195 = pneg %p194
      // Predicated region
      $region9: #{tpu_custom_call.1} parent=5 // pred_check
        _
      $region10: #{tpu_custom_call.1} parent=5 // pred_check_branch
        %197 = sbr.rel (%p194) target = $region12
      $region11: #{tpu_custom_call.1} parent=5 // pred_region
        %s198 = ssub.s32 %s22, 1
        // Predicated region
        $region13: #{tpu_custom_call.1} parent=11 // pred_check
          %p199 = pneg %p95
        $region14: #{tpu_custom_call.1} parent=11 // pred_check_branch
          %201 = sbr.rel (%p199) target = $region16
        $region15: #{tpu_custom_call.1} parent=11 // pred_region
          %s203 = ssub.s32 1024, 1024
          %204 = vsyncadd [#allocation6], %s203
          %s205 = sshll.u32 [#allocation7], 4
          %s206 = int_to_ptr.vmem [resolvable:$true] %s205
          %211 = dma.hbm_to_vmem [thread:$0]  %s2, 1024, %s206, [#allocation6], 64, 64, 4
        $region16: #{tpu_custom_call.1} parent=11 // pred_fallthru
          _
        // Predicated region
        $region17: #{tpu_custom_call.1} parent=11 // pred_check
          %p212 = pneg %p116
        $region18: #{tpu_custom_call.1} parent=11 // pred_check_branch
          %214 = sbr.rel (%p212) target = $region20
        $region19: #{tpu_custom_call.1} parent=11 // pred_region
          _
        $region20: #{tpu_custom_call.1} parent=11 // pred_fallthru
          _
        // Predicated region
        $region21: #{tpu_custom_call.1} parent=11 // pred_check
          %p215 = pneg %p137
        $region22: #{tpu_custom_call.1} parent=11 // pred_check_branch
          %217 = sbr.rel (%p215) target = $region24
        $region23: #{tpu_custom_call.1} parent=11 // pred_region
          %s219 = ssub.s32 1024, 1024
          %220 = vsyncadd [#allocation9], %s219
          %s221 = sshll.u32 [#allocation8], 4
          %s222 = int_to_ptr.vmem [resolvable:$true] %s221
          %227 = dma.hbm_to_vmem [thread:$0]  %s4, 1024, %s222, [#allocation9], 64, 64, 4
        $region24: #{tpu_custom_call.1} parent=11 // pred_fallthru
          _
        // Predicated region
        $region25: #{tpu_custom_call.1} parent=11 // pred_check
          %p228 = pneg %p158
        $region26: #{tpu_custom_call.1} parent=11 // pred_check_branch
          %230 = sbr.rel (%p228) target = $region28
        $region27: #{tpu_custom_call.1} parent=11 // pred_region
          _
        $region28: #{tpu_custom_call.1} parent=11 // pred_fallthru
          _
      $region12: #{tpu_custom_call.1} parent=5 // pred_fallthru
        _
      %p231 = scmp.lt.s32.totalorder %s22, 2
      // Predicated region
      $region29: #{tpu_custom_call.1} parent=5 // pred_check
        %p232 = pneg %p231
      $region30: #{tpu_custom_call.1} parent=5 // pred_check_branch
        %234 = sbr.rel (%p232) target = $region32
      $region31: #{tpu_custom_call.1} parent=5 // pred_region
        // Predicated region
        $region33: #{tpu_custom_call.1} parent=31 // pred_check
          %p235 = pneg %p42
        $region34: #{tpu_custom_call.1} parent=31 // pred_check_branch
          %237 = sbr.rel (%p235) target = $region36
        $region35: #{tpu_custom_call.1} parent=31 // pred_region
          %s238 = sand.u32 %s32, 1
          %s239 = scalar_lea.sflag [#allocation3], %s238
          %s240 = sand.u32 %s32, 1
          %s241 = smul.addr %s240, 8
          %s242 = scalar_lea.vmem [#allocation2], %s241
          %s244 = ssub.s32 128, 128
          %245 = vsyncadd %s239, %s244
          %s246 = smul.addr %s22, 128
          %s247 = scalar_lea.hbm %s0, %s246
          %s249 = sshll.u32 %s242, 4
          %s250 = int_to_ptr.vmem [resolvable:$true] %s249
          %252 = dma.hbm_to_vmem [thread:$0]  %s247, 128, %s250, %s239
        $region36: #{tpu_custom_call.1} parent=31 // pred_fallthru
          _
        // Predicated region
        $region37: #{tpu_custom_call.1} parent=31 // pred_check
          %p253 = pneg %p68
        $region38: #{tpu_custom_call.1} parent=31 // pred_check_branch
          %255 = sbr.rel (%p253) target = $region40
        $region39: #{tpu_custom_call.1} parent=31 // pred_region
          %s256 = sand.u32 %s22, 1
          %s257 = scalar_lea.sflag [#allocation6], %s256
          %s258 = sand.u32 %s58, 1
          %s259 = smul.addr %s258, 4
          %s260 = scalar_lea.vmem [#allocation5], %s259
          %s262 = ssub.s32 64, 64
          %263 = vsyncadd %s257, %s262
          %s264 = smul.addr %s22, 64
          %s265 = scalar_lea.hbm %s1, %s264
          %s267 = sshll.u32 %s260, 4
          %s268 = int_to_ptr.vmem [resolvable:$true] %s267
          %270 = dma.hbm_to_vmem [thread:$0]  %s265, 64, %s268, %s257
        $region40: #{tpu_custom_call.1} parent=31 // pred_fallthru
          _
      $region32: #{tpu_custom_call.1} parent=5 // pred_fallthru
        _
      %p271 = scmp.le.s32.totalorder 1, %s22
      %p272 = scmp.lt.s32.totalorder %s22, 3
      %p273 = pnand %p271, %p272
      %p274 = pneg %p273
      // Predicated region
      $region41: #{tpu_custom_call.1} parent=5 // pred_check
        _
      $region42: #{tpu_custom_call.1} parent=5 // pred_check_branch
        %276 = sbr.rel (%p273) target = $region44
      $region43: #{tpu_custom_call.1} parent=5 // pred_region
        %s277 = ssub.s32 %s22, 1
        %s278 = sand.u32 %s35, 1
        %s279 = scalar_lea.sflag [#allocation3], %s278
        %s280 = sand.u32 %s35, 1
        %s281 = smul.addr %s280, 8
        %s282 = scalar_lea.vmem [#allocation2], %s281
        // Predicated region
        $region45: #{tpu_custom_call.1} parent=43 // pred_check
          %p283 = pneg %p48
        $region46: #{tpu_custom_call.1} parent=43 // pred_check_branch
          %285 = sbr.rel (%p283) target = $region48
        $region47: #{tpu_custom_call.1} parent=43 // pred_region
          %286 = dma.done %s279, 128
        $region48: #{tpu_custom_call.1} parent=43 // pred_fallthru
          _
        %s287 = sand.u32 %s27, 1
        %s288 = scalar_lea.sflag [#allocation6], %s287
        %s289 = sand.u32 %s61, 1
        %s290 = smul.addr %s289, 4
        %s291 = scalar_lea.vmem [#allocation5], %s290
        // Predicated region
        $region49: #{tpu_custom_call.1} parent=43 // pred_check
          %p292 = pneg %p74
        $region50: #{tpu_custom_call.1} parent=43 // pred_check_branch
          %294 = sbr.rel (%p292) target = $region52
        $region51: #{tpu_custom_call.1} parent=43 // pred_region
          %295 = dma.done %s288, 64
        $region52: #{tpu_custom_call.1} parent=43 // pred_fallthru
          _
        // Predicated region
        $region53: #{tpu_custom_call.1} parent=43 // pred_check
          %p296 = pneg %p95
        $region54: #{tpu_custom_call.1} parent=43 // pred_check_branch
          %298 = sbr.rel (%p296) target = $region56
        $region55: #{tpu_custom_call.1} parent=43 // pred_region
          %299 = dma.done [#allocation6], 1024
        $region56: #{tpu_custom_call.1} parent=43 // pred_fallthru
          _
        // Predicated region
        $region57: #{tpu_custom_call.1} parent=43 // pred_check
          %p300 = pneg %p137
        $region58: #{tpu_custom_call.1} parent=43 // pred_check_branch
          %302 = sbr.rel (%p300) target = $region60
        $region59: #{tpu_custom_call.1} parent=43 // pred_region
          %303 = dma.done [#allocation9], 1024
        $region60: #{tpu_custom_call.1} parent=43 // pred_fallthru
          _
        %s304 = sand.u32 %s35, 1
        %s305 = scalar_lea.sflag [#allocation3], %s304
        %s306 = sand.u32 %s35, 1
        %s307 = smul.addr %s306, 8
        %s308 = scalar_lea.vmem [#allocation2], %s307
        %p309 = pneg %p48
        %p310 = pneg %p45
        %s311 = sand.u32 %s27, 1
        %s312 = scalar_lea.sflag [#allocation6], %s311
        %s313 = sand.u32 %s61, 1
        %s314 = smul.addr %s313, 4
        %s315 = scalar_lea.vmem [#allocation5], %s314
        %p316 = pneg %p74
        %p317 = pneg %p71
        %p318 = pneg %p95
        %p319 = pneg %p92
        %p320 = pneg %p116
        %p321 = pneg %p113
        %p322 = pneg %p137
        %p323 = pneg %p134
        %p324 = pneg %p158
        %p325 = pneg %p155
        %p326 = pneg %p184
        %p327 = pneg %p181
        %s328 = sand.u32 %s171, 1
        %s329 = scalar_lea.sflag [#allocation4], %s328
        %s330 = sand.u32 %s171, 1
        %s331 = smul.addr %s330, 8
        %s332 = scalar_lea.vmem [#allocation10], %s331
        %v334 = vld [vmem:[%s282] sm:$0xff]
        %v335 = vrot.slane %v334, 4
        %v336 = vadd.f32 %v334, %v335
        %v337 = vrot.slane %v336, 2
        %v338 = vadd.f32 %v336, %v337
        %v339 = vrot.slane %v338, 1
        %v340 = vadd.f32 %v338, %v339
        %v341 = vrcp.pop 8.0
        %v342 = vmul.f32 %v340, %v341
        %v343 = vld [vmem:[%s291] sm:$0xf]
        %v344 = vld [vmem:[#allocation7] sm:$0xf]
        %v345 = vld [vmem:[#allocation7 + $0x4] sm:$0xf]
        %v346 = vld [vmem:[#allocation7 + $0x8] sm:$0xf]
        %v347 = vld [vmem:[#allocation7 + $0xc] sm:$0xf]
        %v348 = vld [vmem:[#allocation7 + $0x10] sm:$0xf]
        %v349 = vld [vmem:[#allocation7 + $0x14] sm:$0xf]
        %v350 = vld [vmem:[#allocation7 + $0x18] sm:$0xf]
        %v351 = vld [vmem:[#allocation7 + $0x1c] sm:$0xf]
        %v352 = vld [vmem:[#allocation7 + $0x20] sm:$0xf]
        %v353 = vld [vmem:[#allocation7 + $0x24] sm:$0xf]
        %v354 = vld [vmem:[#allocation7 + $0x28] sm:$0xf]
        %v355 = vld [vmem:[#allocation7 + $0x2c] sm:$0xf]
        %v356 = vld [vmem:[#allocation7 + $0x30] sm:$0xf]
        %v357 = vld [vmem:[#allocation7 + $0x34] sm:$0xf]
        %v358 = vld [vmem:[#allocation7 + $0x38] sm:$0xf]
        %v359 = vld [vmem:[#allocation7 + $0x3c] sm:$0xf]
        %v360 = vld [vmem:[%s3] sm:$0x1]
        %v362 = vlaneseq
        %v363 = vshrl.u32 %v362, 7
        %v364 = vsub.s32 0, %v363
        %v365 = vrot.slane %v360, %v364
        %v383 = vunpack.c.l.b16 %v344
        %v384 = vunpack.c.l.b16 %v345
        %v385 = vunpack.c.l.b16 %v346
        %v386 = vunpack.c.l.b16 %v347
        %v387 = vunpack.c.l.b16 %v348
        %v388 = vunpack.c.l.b16 %v349
        %v389 = vunpack.c.l.b16 %v350
        %v390 = vunpack.c.l.b16 %v351
        %v391 = vunpack.c.l.b16 %v352
        %v392 = vunpack.c.l.b16 %v353
        %v393 = vunpack.c.l.b16 %v354
        %v394 = vunpack.c.l.b16 %v355
        %v395 = vunpack.c.l.b16 %v356
        %v396 = vunpack.c.l.b16 %v357
        %v397 = vunpack.c.l.b16 %v358
        %v398 = vunpack.c.l.b16 %v359
        %v399 = vpack.c.b16 %v384, %v383
        %v400 = vpack.c.b16 %v386, %v385
        %v401 = vpack.c.b16 %v388, %v387
        %v402 = vpack.c.b16 %v390, %v389
        %v403 = vpack.c.b16 %v392, %v391
        %v404 = vpack.c.b16 %v394, %v393
        %v405 = vpack.c.b16 %v396, %v395
        %v406 = vpack.c.b16 %v398, %v397
        %415 = vmatprep.subr.bf16.mxu0 0
        %416 = vmatpush1.bf16.msra.mxu0 %v399
        %417 = vmatprep.subr.bf16.mxu0 0
        %418 = vmatpush1.bf16.msra.mxu0 %v400
        %419 = vmatprep.subr.bf16.mxu0 0
        %420 = vmatpush1.bf16.msra.mxu0 %v401
        %421 = vmatprep.subr.bf16.mxu0 0
        %422 = vmatpush1.bf16.msra.mxu0 %v402
        %423 = vmatprep.subr.bf16.mxu0 0
        %424 = vmatpush1.bf16.msra.mxu0 %v403
        %425 = vmatprep.subr.bf16.mxu0 0
        %426 = vmatpush1.bf16.msra.mxu0 %v404
        %427 = vmatprep.subr.bf16.mxu0 0
        %428 = vmatpush1.bf16.msra.mxu0 %v405
        %429 = vmatprep.subr.bf16.mxu0 0
        %430 = vmatpush1.bf16.msra.mxu0 %v406
        %431 = vmatprep.subr.bf16.mxu0 0
        %432 = vmatpush1.bf16.msra.mxu0 0
        %433 = vmatprep.subr.bf16.mxu0 0
        %434 = vmatpush1.bf16.msra.mxu0 0
        %435 = vmatprep.subr.bf16.mxu0 0
        %436 = vmatpush1.bf16.msra.mxu0 0
        %437 = vmatprep.subr.bf16.mxu0 0
        %438 = vmatpush1.bf16.msra.mxu0 0
        %439 = vmatprep.subr.bf16.mxu0 0
        %440 = vmatpush1.bf16.msra.mxu0 0
        %441 = vmatprep.subr.bf16.mxu0 0
        %442 = vmatpush1.bf16.msra.mxu0 0
        %443 = vmatprep.subr.bf16.mxu0 0
        %444 = vmatpush1.bf16.msra.mxu0 0
        %445 = vmatprep.subr.bf16.mxu0 0
        %446 = vmatpush1.bf16.msra.mxu0 0
        %447 = vmatprep.mubr.bf16.mxu0 0
        %448 = vmatmul.mubr.bf16.gmra.mrb[0].mxu0 %v343
        %v449 = vpop.f32.mrb[0].mxu0
        %v450 = vadd.f32 %v365, %v449
        %v451 = vpop.f32.mrb[0].mxu0
        %v452 = vpop.f32.mrb[0].mxu0
        %v453 = vpop.f32.mrb[0].mxu0
        %454 = vdwg.mxu0
        %v455 = vmax.f32 %v450, 0.0
        %v456 = vpack.c.bf16 %v455, %v455
        %v457 = vld [vmem:[#allocation8] sm:$0xf]
        %v458 = vld [vmem:[#allocation8 + $0x4] sm:$0xf]
        %v459 = vld [vmem:[#allocation8 + $0x8] sm:$0xf]
        %v460 = vld [vmem:[#allocation8 + $0xc] sm:$0xf]
        %v461 = vld [vmem:[#allocation8 + $0x10] sm:$0xf]
        %v462 = vld [vmem:[#allocation8 + $0x14] sm:$0xf]
        %v463 = vld [vmem:[#allocation8 + $0x18] sm:$0xf]
        %v464 = vld [vmem:[#allocation8 + $0x1c] sm:$0xf]
        %v465 = vld [vmem:[#allocation8 + $0x20] sm:$0xf]
        %v466 = vld [vmem:[#allocation8 + $0x24] sm:$0xf]
        %v467 = vld [vmem:[#allocation8 + $0x28] sm:$0xf]
        %v468 = vld [vmem:[#allocation8 + $0x2c] sm:$0xf]
        %v469 = vld [vmem:[#allocation8 + $0x30] sm:$0xf]
        %v470 = vld [vmem:[#allocation8 + $0x34] sm:$0xf]
        %v471 = vld [vmem:[#allocation8 + $0x38] sm:$0xf]
        %v472 = vld [vmem:[#allocation8 + $0x3c] sm:$0xf]
        %v473 = vld [vmem:[%s5] sm:$0x1]
        %v475 = vlaneseq
        %v476 = vshrl.u32 %v475, 7
        %v477 = vsub.s32 0, %v476
        %v478 = vrot.slane %v473, %v477
        %v496 = vunpack.c.l.b16 %v457
        %v497 = vunpack.c.l.b16 %v458
        %v498 = vunpack.c.l.b16 %v459
        %v499 = vunpack.c.l.b16 %v460
        %v500 = vunpack.c.l.b16 %v461
        %v501 = vunpack.c.l.b16 %v462
        %v502 = vunpack.c.l.b16 %v463
        %v503 = vunpack.c.l.b16 %v464
        %v504 = vunpack.c.l.b16 %v465
        %v505 = vunpack.c.l.b16 %v466
        %v506 = vunpack.c.l.b16 %v467
        %v507 = vunpack.c.l.b16 %v468
        %v508 = vunpack.c.l.b16 %v469
        %v509 = vunpack.c.l.b16 %v470
        %v510 = vunpack.c.l.b16 %v471
        %v511 = vunpack.c.l.b16 %v472
        %v512 = vpack.c.b16 %v497, %v496
        %v513 = vpack.c.b16 %v499, %v498
        %v514 = vpack.c.b16 %v501, %v500
        %v515 = vpack.c.b16 %v503, %v502
        %v516 = vpack.c.b16 %v505, %v504
        %v517 = vpack.c.b16 %v507, %v506
        %v518 = vpack.c.b16 %v509, %v508
        %v519 = vpack.c.b16 %v511, %v510
        %528 = vmatprep.subr.bf16.mxu0 0
        %529 = vmatpush1.bf16.msra.mxu0 %v512
        %530 = vmatprep.subr.bf16.mxu0 0
        %531 = vmatpush1.bf16.msra.mxu0 %v513
        %532 = vmatprep.subr.bf16.mxu0 0
        %533 = vmatpush1.bf16.msra.mxu0 %v514
        %534 = vmatprep.subr.bf16.mxu0 0
        %535 = vmatpush1.bf16.msra.mxu0 %v515
        %536 = vmatprep.subr.bf16.mxu0 0
        %537 = vmatpush1.bf16.msra.mxu0 %v516
        %538 = vmatprep.subr.bf16.mxu0 0
        %539 = vmatpush1.bf16.msra.mxu0 %v517
        %540 = vmatprep.subr.bf16.mxu0 0
        %541 = vmatpush1.bf16.msra.mxu0 %v518
        %542 = vmatprep.subr.bf16.mxu0 0
        %543 = vmatpush1.bf16.msra.mxu0 %v519
        %544 = vmatprep.subr.bf16.mxu0 0
        %545 = vmatpush1.bf16.msra.mxu0 0
        %546 = vmatprep.subr.bf16.mxu0 0
        %547 = vmatpush1.bf16.msra.mxu0 0
        %548 = vmatprep.subr.bf16.mxu0 0
        %549 = vmatpush1.bf16.msra.mxu0 0
        %550 = vmatprep.subr.bf16.mxu0 0
        %551 = vmatpush1.bf16.msra.mxu0 0
        %552 = vmatprep.subr.bf16.mxu0 0
        %553 = vmatpush1.bf16.msra.mxu0 0
        %554 = vmatprep.subr.bf16.mxu0 0
        %555 = vmatpush1.bf16.msra.mxu0 0
        %556 = vmatprep.subr.bf16.mxu0 0
        %557 = vmatpush1.bf16.msra.mxu0 0
        %558 = vmatprep.subr.bf16.mxu0 0
        %559 = vmatpush1.bf16.msra.mxu0 0
        %560 = vmatprep.mubr.bf16.mxu0 0
        %561 = vmatmul.mubr.bf16.gmra.mrb[0].mxu0 %v456
        %v562 = vpop.f32.mrb[0].mxu0
        %v563 = vadd.f32 %v478, %v562
        %v564 = vpop.f32.mrb[0].mxu0
        %v565 = vpop.f32.mrb[0].mxu0
        %v566 = vpop.f32.mrb[0].mxu0
        %567 = vdwg.mxu0
        %v568 = vrot.slane %v563, 4
        %v569 = vadd.f32 %v563, %v568
        %v570 = vrot.slane %v569, 2
        %v571 = vadd.f32 %v569, %v570
        %v572 = vrot.slane %v571, 1
        %v573 = vadd.f32 %v571, %v572
        %v574 = vmul.f32 %v573, %v341
        %v575 = vsub.f32 %v563, %v574
        %v576 = vadd.f32 %v575, %v342
        %577 = vst [vmem:[%s332] sm:$0xff] %v576
        %s578 = sand.u32 %s171, 1
        %s579 = scalar_lea.sflag [#allocation4], %s578
        %s580 = sand.u32 %s171, 1
        %s581 = smul.addr %s580, 8
        %s582 = scalar_lea.vmem [#allocation10], %s581
        // Predicated region
        $region61: #{tpu_custom_call.1} parent=43 // pred_check
          %p583 = pneg %p181
        $region62: #{tpu_custom_call.1} parent=43 // pred_check_branch
          %585 = sbr.rel (%p583) target = $region64
        $region63: #{tpu_custom_call.1} parent=43 // pred_region
          %s587 = ssub.s32 128, 128
          %588 = vsyncadd %s579, %s587
          %s589 = smul.addr %s27, 128
          %s590 = scalar_lea.hbm %s6, %s589
          %s592 = sshll.u32 %s582, 4
          %s593 = int_to_ptr.vmem [resolvable:$true] %s592
          %595 = dma.vmem_to_hbm [thread:$0]  %s593, 128, %s590, %s579
        $region64: #{tpu_custom_call.1} parent=43 // pred_fallthru
          _
      $region44: #{tpu_custom_call.1} parent=5 // pred_fallthru
        _
      %p596 = scmp.le.s32.totalorder 2, %s22
      // Predicated region
      $region65: #{tpu_custom_call.1} parent=5 // pred_check
        %p597 = pneg %p596
      $region66: #{tpu_custom_call.1} parent=5 // pred_check_branch
        %599 = sbr.rel (%p597) target = $region68
      $region67: #{tpu_custom_call.1} parent=5 // pred_region
        %s600 = ssub.s32 %s22, 2
        // Predicated region
        $region69: #{tpu_custom_call.1} parent=67 // pred_check
          %p601 = pneg %p187
        $region70: #{tpu_custom_call.1} parent=67 // pred_check_branch
          %603 = sbr.rel (%p601) target = $region72
        $region71: #{tpu_custom_call.1} parent=67 // pred_region
          %s604 = sand.u32 %s172, 1
          %s605 = scalar_lea.sflag [#allocation4], %s604
          %s606 = sand.u32 %s172, 1
          %s607 = smul.addr %s606, 8
          %s608 = scalar_lea.vmem [#allocation10], %s607
          %609 = dma.done %s605, 128
        $region72: #{tpu_custom_call.1} parent=67 // pred_fallthru
          _
      $region68: #{tpu_custom_call.1} parent=5 // pred_fallthru
        _
    $region6: #{tpu_custom_call.1} parent=1 // loop_footer
      %s26 = sadd.s32 1, %s22
    $region7: #{tpu_custom_call.1} parent=1 // loop_footer_branch
      %21 = sbr.rel target = $region3
    $region8: #{tpu_custom_call.1} parent=1 // loop_exit
      _
    %610 = vsyncpa [#allocation3], 1
    %s611 = scalar_lea.sflag [#allocation3], 1
    %612 = vsyncpa %s611, 1
    %613 = vsyncpa [#allocation6], 1
    %s614 = scalar_lea.sflag [#allocation6], 1
    %615 = vsyncpa %s614, 1
    %616 = vsyncpa [#allocation9], 1
    %617 = vsyncpa [#allocation4], 1
    %s618 = scalar_lea.sflag [#allocation4], 1
    %619 = vsyncpa %s618, 1

</llo_original>
